<compile_context>
chip_gen: v5e
topology: v5e:2x2
jax: 0.10.0
libtpu: 0.0.40
codegen_flags: <defaults>
</compile_context>

<pallas_src>
import math

import jax
import jax.numpy as jnp
from jax import lax
from jax.experimental import pallas as pl
from jax.experimental.pallas import tpu as pltpu

_INV_SQRT2 = 1.0 / math.sqrt(2.0)
_GELU_TANH_C = 0.7978845608028654  # sqrt(2/pi)


def _round_up(x, m):
    return ((x + m - 1) // m) * m


def _tpu_vmem_capacity_bytes():
    """Best-effort physical VMEM capacity per core; safe fallbacks on failure."""
    try:
        return int(pltpu.get_tpu_info().vmem_capacity_bytes)
    except Exception:
        pass
    try:
        kind = jax.devices()[0].device_kind.lower()
    except Exception:
        kind = ""
    if "v7" in kind:
        return 64 * 1024 * 1024
    return 128 * 1024 * 1024


def _ff_kernel(x_ref, gamma_ref, beta_ref, w1_ref, b1_ref, w2_ref, b2_ref,
               o_ref, xn_ref):
    """One (tile_m, D) row tile; grid axis 1 streams the hidden dim H in tile_h chunks.

    x_ref  : (tile_m, D) f32   -- same block across all h steps (LN source + residual)
    w1_ref : (D, tile_h) bf16,  w2_ref : (tile_h, D) bf16
    xn_ref : (tile_m, D) bf16 VMEM scratch (LayerNorm output, computed once per row tile)
    o_ref  : (tile_m, D) f32   -- VMEM-resident across the h axis; doubles as accumulator
    """
    h_step = pl.program_id(1)

    @pl.when(h_step == 0)
    def _():
        # --- LayerNorm over features; eps = 1e-6 as explicitly passed in the module ---
        x = x_ref[...]
        mean = jnp.mean(x, axis=-1, keepdims=True)
        var = jnp.mean((x - mean) * (x - mean), axis=-1, keepdims=True)
        xn = (x - mean) * lax.rsqrt(var + 1e-6)
        xn_ref[...] = (xn * gamma_ref[...] + beta_ref[...]).astype(jnp.bfloat16)
        # Seed the resident output block with residual + fc2 bias; fc2 partials
        # accumulate directly into it (no separate f32 scratch, no final copy pass).
        o_ref[...] = (x + b2_ref[...]).astype(o_ref.dtype)

    # --- fc1 chunk: (tile_m, D) @ (D, tile_h), bf16 operands / f32 accumulate ---
    h = jnp.dot(xn_ref[...], w1_ref[...], preferred_element_type=jnp.float32)
    h = h + b1_ref[...]
    # tanh-approx GELU: tanh goes to the EUP slot, keeping the VALU slot off the
    # critical path alongside the MXU.
    # TODO(synk): switch back to 0.5*h*(1+erf(h/sqrt(2))) if bit parity with
    # F.gelu(approximate='none') is required.
    h = 0.5 * h * (1.0 + jnp.tanh(_GELU_TANH_C * (h + 0.044715 * (h * h * h))))

    # --- fc2 chunk: accumulate the partial (tile_m, D) product into the output block ---
    o_ref[...] += jnp.dot(h.astype(jnp.bfloat16), w2_ref[...],
                          preferred_element_type=jnp.float32).astype(o_ref.dtype)


def feed_forward(x, gamma, beta, w1, b1, w2, b2, *, tile_m=None, tile_h=None):
    """x: (B, S, D) float32. Weights in (in, out) layout: w1 (D, 4D), w2 (4D, D).

    Pass w1/w2 already cast to bf16 (done once at parameter init) to avoid a per-call
    HBM round-trip for the cast.
    """
    B, S, D = x.shape
    H = w1.shape[1]
    M = B * S

    # --- per-generation VMEM budget ------------------------------------------------
    vmem_cap = _tpu_vmem_capacity_bytes()
    small_vmem = vmem_cap <= 64 * 1024 * 1024            # v7x-class: 64 MiB / TC
    vmem_limit = min(vmem_cap - (8 << 20), 100 << 20)    # leave compiler headroom
    vmem_limit = max(vmem_limit, 32 << 20)

    # --- tile selection -------------------------------------------------------------
    m_rows = _round_up(max(M, 1), 8)
    if tile_m is None:
        # tile_m sets the arithmetic intensity of weight re-streaming (FLOPs/byte ~ tile_m).
        tile_m = min(512, m_rows)
        # Keep >= 2 row tiles on the parallel axis (megacore) when there are enough rows.
        if m_rows >= 256 and tile_m >= m_rows:
            tile_m = _round_up((m_rows + 1) // 2, 8)
    tile_m = min(_round_up(tile_m, 8), m_rows)
    assert tile_m % 8 == 0

    if tile_h is None:
        cands = (256, 128) if small_vmem else (2048, 1024, 512, 256, 128)
        tile_h = next((t for t in cands if H % t == 0), H)
    assert H % tile_h == 0
    assert tile_h % 128 == 0 or tile_h == H

    def _working_set(tm, th):
        # x + out blocks (f32, double-buffered), xn scratch (bf16),
        # w1 + w2 chunks (bf16, double-buffered), biases / LN params (double-buffered).
        return (4 * tm * D * 4
                + tm * D * 2
                + 4 * D * th * 2
                + 4 * (th + 3 * D) * 4)

    # Shrink tile_h first (cheapest), then tile_m, until the working set fits the budget.
    while _working_set(tile_m, tile_h) > vmem_limit and tile_h >= 256 and tile_h % 2 == 0:
        tile_h //= 2
    while _working_set(tile_m, tile_h) > vmem_limit and tile_m > 8:
        tile_m = max(8, _round_up(tile_m // 2, 8))

    # --- operands -------------------------------------------------------------------
    x2 = x.reshape(M, D)
    gamma2 = gamma.reshape(1, D).astype(jnp.float32)
    beta2 = beta.reshape(1, D).astype(jnp.float32)
    b1_2 = b1.reshape(1, H).astype(jnp.float32)
    b2_2 = b2.reshape(1, D).astype(jnp.float32)
    # Fallback cast only; callers should pre-cast once at parameter-init time.
    w1_bf = w1 if w1.dtype == jnp.bfloat16 else w1.astype(jnp.bfloat16)
    w2_bf = w2 if w2.dtype == jnp.bfloat16 else w2.astype(jnp.bfloat16)

    n_row_tiles = pl.cdiv(M, tile_m)
    grid = (n_row_tiles, H // tile_h)

    cost = pl.CostEstimate(
        flops=4 * M * D * H,                              # two (M,D,H)-sized matmuls
        transcendentals=M * H,                            # tanh on the hidden activations
        bytes_accessed=(2 * M * D * 4                     # x in + out (f32)
                        + n_row_tiles * 2 * D * H * 2     # bf16 weights re-streamed per row tile
                        + n_row_tiles * (H + 3 * D) * 4), # biases + LN params per row tile
    )

    out2 = pl.pallas_call(
        _ff_kernel,
        out_shape=jax.ShapeDtypeStruct((M, D), x.dtype),
        grid_spec=pltpu.PrefetchScalarGridSpec(
            num_scalar_prefetch=0,
            grid=grid,
            in_specs=[
                pl.BlockSpec((tile_m, D), lambda i, h: (i, 0)),   # x tile (resident over h)
                pl.BlockSpec((1, D), lambda i, h: (0, 0)),        # gamma
                pl.BlockSpec((1, D), lambda i, h: (0, 0)),        # beta
                pl.BlockSpec((D, tile_h), lambda i, h: (0, h)),   # w1 chunk (streamed)
                pl.BlockSpec((1, tile_h), lambda i, h: (0, h)),   # b1 chunk
                pl.BlockSpec((tile_h, D), lambda i, h: (h, 0)),   # w2 chunk (streamed)
                pl.BlockSpec((1, D), lambda i, h: (0, 0)),        # b2
            ],
            out_specs=pl.BlockSpec((tile_m, D), lambda i, h: (i, 0)),
            scratch_shapes=[
                pltpu.VMEM((tile_m, D), jnp.bfloat16),   # xn (LayerNorm output)
            ],
        ),
        compiler_params=pltpu.CompilerParams(
            dimension_semantics=("parallel", "arbitrary"),
            vmem_limit_bytes=int(vmem_limit),
        ),
        cost_estimate=cost,
    )(x2, gamma2, beta2, w1_bf, b1_2, w2_bf, b2_2)

    return out2.reshape(B, S, D)


def _reference_f32(x, gamma, beta, w1, b1, w2, b2):
    # Pure-f32 reference mirroring the PyTorch forward (exact erf GELU).
    mean = jnp.mean(x, axis=-1, keepdims=True)
    var = jnp.mean((x - mean) ** 2, axis=-1, keepdims=True)
    xn = (x - mean) / jnp.sqrt(var + 1e-6) * gamma + beta
    h = jax.nn.gelu(xn @ w1 + b1, approximate=False)
    return h @ w2 + b2 + x


def _reference_mixed(x, gamma, beta, w1, b1, w2, b2):
    # Mirrors the kernel's precision: bf16 matmul operands, f32 accumulation /
    # elementwise, tanh-approx GELU.
    mean = jnp.mean(x, axis=-1, keepdims=True)
    var = jnp.mean((x - mean) ** 2, axis=-1, keepdims=True)
    xn = (x - mean) / jnp.sqrt(var + 1e-6) * gamma + beta
    h = jnp.einsum("bsd,dh->bsh", xn.astype(jnp.bfloat16), w1.astype(jnp.bfloat16),
                   preferred_element_type=jnp.float32) + b1
    h = 0.5 * h * (1.0 + jnp.tanh(_GELU_TANH_C * (h + 0.044715 * h ** 3)))
    out = jnp.einsum("bsh,hd->bsd", h.astype(jnp.bfloat16), w2.astype(jnp.bfloat16),
                     preferred_element_type=jnp.float32) + b2
    return out + x


if __name__ == "__main__":
    # out_channel = 128 keeps the output tiles lane-dense (multiple of 128 lanes).
    B, S, D = 2, 128, 128
    H = 4 * D

    key = jax.random.PRNGKey(0)
    kx, kw1, kb1, kw2, kb2, kg, kb = jax.random.split(key, 7)

    x = jax.random.normal(kx, (B, S, D), dtype=jnp.float32)
    gamma = 1.0 + 0.1 * jax.random.normal(kg, (D,), dtype=jnp.float32)
    beta = 0.1 * jax.random.normal(kb, (D,), dtype=jnp.float32)
    w1 = jax.random.normal(kw1, (D, H), dtype=jnp.float32) * (1.0 / math.sqrt(D))
    b1 = jax.random.normal(kb1, (H,), dtype=jnp.float32) * 0.01
    w2 = jax.random.normal(kw2, (H, D), dtype=jnp.float32) * (1.0 / math.sqrt(H))
    b2 = jax.random.normal(kb2, (D,), dtype=jnp.float32) * 0.01

    # Pre-cast weights to bf16 ONCE at "parameter-init time" (perf-review item), not per call.
    w1_bf = w1.astype(jnp.bfloat16)
    w2_bf = w2.astype(jnp.bfloat16)

    # 1) auto-selected tiles (per-generation defaults)
    out = feed_forward(x, gamma, beta, w1_bf, b1, w2_bf, b2)
    out = jax.block_until_ready(out)

    # 2) explicit small tiles: 2 parallel row tiles x 4 hidden-dim chunks — exercises
    #    the resident-output accumulation path across multiple h steps.
    out_small = feed_forward(x, gamma, beta, w1_bf, b1, w2_bf, b2, tile_m=128, tile_h=128)
    out_small = jax.block_until_ready(out_small)

    ref_mixed = _reference_mixed(x, gamma, beta, w1, b1, w2, b2)
    ref_f32 = _reference_f32(x, gamma, beta, w1, b1, w2, b2)

    assert out.shape == (B, S, D)
    assert out_small.shape == (B, S, D)
    assert jnp.max(jnp.abs(out - ref_mixed)) < 1e-2, "mismatch vs precision-matched reference"
    assert jnp.max(jnp.abs(out_small - ref_mixed)) < 1e-2, "mismatch vs precision-matched reference (small tiles)"
    assert jnp.max(jnp.abs(out - ref_f32)) < 2e-1, "mismatch vs f32 reference"
    assert jnp.max(jnp.abs(out_small - out)) < 1e-2, "tile-size dependence"

    print("KERNEL_OK")
</pallas_src>

<mosaic_0001>
module attributes {stable_mosaic.version = 11 : i64} {
  func.func @_ff_kernel(%arg0: i32, %arg1: i32, %arg2: memref<128x128xf32, #tpu.memory_space<vmem>>, %arg3: memref<1x128xf32, #tpu.memory_space<vmem>>, %arg4: memref<1x128xf32, #tpu.memory_space<vmem>>, %arg5: memref<128x512xbf16, #tpu.memory_space<vmem>>, %arg6: memref<1x512xf32, #tpu.memory_space<vmem>>, %arg7: memref<512x128xbf16, #tpu.memory_space<vmem>>, %arg8: memref<1x128xf32, #tpu.memory_space<vmem>>, %arg9: memref<128x128xf32, #tpu.memory_space<vmem>>, %arg10: memref<128x128xbf16, #tpu.memory_space<vmem>>) attributes {dimension_semantics = [#tpu.dimension_semantics<parallel>, #tpu.dimension_semantics<arbitrary>], iteration_bounds = array<i64: 2, 1>, scalar_prefetch = 0 : i64, scratch_operands = 1 : i64, tpu.core_type = #tpu.core_type<tc>, window_params = [{transform_indices = @transform_0, window_bounds = array<i64: 128, 128>}, {pipeline_mode = #tpu.pipeline_mode<synchronous>, transform_indices = @transform_1, window_bounds = array<i64: 1, 128>}, {pipeline_mode = #tpu.pipeline_mode<synchronous>, transform_indices = @transform_2, window_bounds = array<i64: 1, 128>}, {transform_indices = @transform_3, window_bounds = array<i64: 128, 512>}, {transform_indices = @transform_4, window_bounds = array<i64: 1, 512>}, {transform_indices = @transform_5, window_bounds = array<i64: 512, 128>}, {pipeline_mode = #tpu.pipeline_mode<synchronous>, transform_indices = @transform_6, window_bounds = array<i64: 1, 128>}, {transform_indices = @transform_7, window_bounds = array<i64: 128, 128>}]} {
    %c0_i32 = arith.constant 0 : i32
    %0 = arith.cmpi eq, %arg1, %c0_i32 : i32
    %1 = arith.extui %0 : i1 to i32
    %c0_i32_0 = arith.constant 0 : i32
    %2 = arith.cmpi ne, %1, %c0_i32_0 : i32
    scf.if %2 {
      %c0_17 = arith.constant 0 : index
      %c0_18 = arith.constant 0 : index
      %28 = vector.load %arg2[%c0_17, %c0_18] : memref<128x128xf32, #tpu.memory_space<vmem>>, vector<128x128xf32>
      %cst_19 = arith.constant dense<0.000000e+00> : vector<128xf32>
      %29 = vector.multi_reduction <add>, %28, %cst_19 [1] : vector<128x128xf32> to vector<128xf32>
      %30 = vector.shape_cast %29 : vector<128xf32> to vector<128x1xf32>
      %cst_20 = arith.constant 1.280000e+02 : f32
      %31 = vector.broadcast %cst_20 : f32 to vector<128x1xf32>
      %32 = arith.divf %30, %31 : vector<128x1xf32>
      %33 = vector.broadcast %32 : vector<128x1xf32> to vector<128x128xf32>
      %34 = arith.subf %28, %33 : vector<128x128xf32>
      %35 = vector.broadcast %32 : vector<128x1xf32> to vector<128x128xf32>
      %36 = arith.subf %28, %35 : vector<128x128xf32>
      %37 = arith.mulf %34, %36 : vector<128x128xf32>
      %cst_21 = arith.constant dense<0.000000e+00> : vector<128xf32>
      %38 = vector.multi_reduction <add>, %37, %cst_21 [1] : vector<128x128xf32> to vector<128xf32>
      %39 = vector.shape_cast %38 : vector<128xf32> to vector<128x1xf32>
      %cst_22 = arith.constant 1.280000e+02 : f32
      %40 = vector.broadcast %cst_22 : f32 to vector<128x1xf32>
      %41 = arith.divf %39, %40 : vector<128x1xf32>
      %42 = vector.broadcast %32 : vector<128x1xf32> to vector<128x128xf32>
      %43 = arith.subf %28, %42 : vector<128x128xf32>
      %cst_23 = arith.constant 9.99999997E-7 : f32
      %44 = vector.broadcast %cst_23 : f32 to vector<128x1xf32>
      %45 = arith.addf %41, %44 : vector<128x1xf32>
      %46 = math.rsqrt %45 : vector<128x1xf32>
      %47 = vector.broadcast %46 : vector<128x1xf32> to vector<128x128xf32>
      %48 = arith.mulf %43, %47 : vector<128x128xf32>
      %c0_24 = arith.constant 0 : index
      %c0_25 = arith.constant 0 : index
      %49 = vector.load %arg3[%c0_24, %c0_25] : memref<1x128xf32, #tpu.memory_space<vmem>>, vector<1x128xf32>
      %50 = vector.broadcast %49 : vector<1x128xf32> to vector<128x128xf32>
      %51 = arith.mulf %48, %50 : vector<128x128xf32>
      %c0_26 = arith.constant 0 : index
      %c0_27 = arith.constant 0 : index
      %52 = vector.load %arg4[%c0_26, %c0_27] : memref<1x128xf32, #tpu.memory_space<vmem>>, vector<1x128xf32>
      %53 = vector.broadcast %52 : vector<1x128xf32> to vector<128x128xf32>
      %54 = arith.addf %51, %53 : vector<128x128xf32>
      %55 = arith.truncf %54 : vector<128x128xf32> to vector<128x128xbf16>
      %c0_28 = arith.constant 0 : index
      %c0_29 = arith.constant 0 : index
      %56 = vector.load %arg10[%c0_28, %c0_29] : memref<128x128xbf16, #tpu.memory_space<vmem>>, vector<128x128xbf16>
      tpu.vector_store %arg10[%c0_28, %c0_29], %55 {strides = array<i32>} : memref<128x128xbf16, #tpu.memory_space<vmem>>, vector<128x128xbf16>,
      %c0_30 = arith.constant 0 : index
      %c0_31 = arith.constant 0 : index
      %57 = vector.load %arg8[%c0_30, %c0_31] : memref<1x128xf32, #tpu.memory_space<vmem>>, vector<1x128xf32>
      %58 = vector.broadcast %57 : vector<1x128xf32> to vector<128x128xf32>
      %59 = arith.addf %28, %58 : vector<128x128xf32>
      %c0_32 = arith.constant 0 : index
      %c0_33 = arith.constant 0 : index
      %60 = vector.load %arg9[%c0_32, %c0_33] : memref<128x128xf32, #tpu.memory_space<vmem>>, vector<128x128xf32>
      tpu.vector_store %arg9[%c0_32, %c0_33], %59 {strides = array<i32>} : memref<128x128xf32, #tpu.memory_space<vmem>>, vector<128x128xf32>,
    } else {
    }
    %c0 = arith.constant 0 : index
    %c0_1 = arith.constant 0 : index
    %3 = vector.load %arg10[%c0, %c0_1] : memref<128x128xbf16, #tpu.memory_space<vmem>>, vector<128x128xbf16>
    %c0_2 = arith.constant 0 : index
    %c0_3 = arith.constant 0 : index
    %4 = vector.load %arg5[%c0_2, %c0_3] : memref<128x512xbf16, #tpu.memory_space<vmem>>, vector<128x512xbf16>
    %cst = arith.constant dense<0.000000e+00> : vector<128x512xf32>
    %5 = tpu.matmul %3, %4, %cst {dimension_numbers = #tpu.dot_dimension_numbers<[1], [0], [0], [1], [0, 0, 1, 1], [], []>} : vector<128x128xbf16>, vector<128x512xbf16>, vector<128x512xf32> -> vector<128x512xf32>
    %c0_4 = arith.constant 0 : index
    %c0_5 = arith.constant 0 : index
    %6 = vector.load %arg6[%c0_4, %c0_5] : memref<1x512xf32, #tpu.memory_space<vmem>>, vector<1x512xf32>
    %7 = vector.broadcast %6 : vector<1x512xf32> to vector<128x512xf32>
    %8 = arith.addf %5, %7 : vector<128x512xf32>
    %cst_6 = arith.constant 5.000000e-01 : f32
    %9 = vector.broadcast %cst_6 : f32 to vector<128x512xf32>
    %10 = arith.mulf %9, %8 : vector<128x512xf32>
    %11 = arith.mulf %8, %8 : vector<128x512xf32>
    %12 = arith.mulf %11, %8 : vector<128x512xf32>
    %cst_7 = arith.constant 4.471500e-02 : f32
    %13 = vector.broadcast %cst_7 : f32 to vector<128x512xf32>
    %14 = arith.mulf %13, %12 : vector<128x512xf32>
    %15 = arith.addf %8, %14 : vector<128x512xf32>
    %cst_8 = arith.constant 0.797884583 : f32
    %16 = vector.broadcast %cst_8 : f32 to vector<128x512xf32>
    %17 = arith.mulf %16, %15 : vector<128x512xf32>
    %18 = math.tanh %17 : vector<128x512xf32>
    %cst_9 = arith.constant 1.000000e+00 : f32
    %19 = vector.broadcast %cst_9 : f32 to vector<128x512xf32>
    %20 = arith.addf %19, %18 : vector<128x512xf32>
    %21 = arith.mulf %10, %20 : vector<128x512xf32>
    %c0_10 = arith.constant 0 : index
    %c0_11 = arith.constant 0 : index
    %22 = vector.load %arg9[%c0_10, %c0_11] : memref<128x128xf32, #tpu.memory_space<vmem>>, vector<128x128xf32>
    %23 = arith.truncf %21 : vector<128x512xf32> to vector<128x512xbf16>
    %c0_12 = arith.constant 0 : index
    %c0_13 = arith.constant 0 : index
    %24 = vector.load %arg7[%c0_12, %c0_13] : memref<512x128xbf16, #tpu.memory_space<vmem>>, vector<512x128xbf16>
    %cst_14 = arith.constant dense<0.000000e+00> : vector<128x128xf32>
    %25 = tpu.matmul %23, %24, %cst_14 {dimension_numbers = #tpu.dot_dimension_numbers<[1], [0], [0], [1], [0, 0, 1, 1], [], []>} : vector<128x512xbf16>, vector<512x128xbf16>, vector<128x128xf32> -> vector<128x128xf32>
    %26 = arith.addf %22, %25 : vector<128x128xf32>
    %c0_15 = arith.constant 0 : index
    %c0_16 = arith.constant 0 : index
    %27 = vector.load %arg9[%c0_15, %c0_16] : memref<128x128xf32, #tpu.memory_space<vmem>>, vector<128x128xf32>
    tpu.vector_store %arg9[%c0_15, %c0_16], %26 {strides = array<i32>} : memref<128x128xf32, #tpu.memory_space<vmem>>, vector<128x128xf32>,
    return
  }
  func.func @transform_0(%arg0: i32, %arg1: i32) -> (i32, i32) {
    %c0_i32 = arith.constant 0 : i32
    %c0_i32_0 = arith.constant 0 : i32
    return %arg0, %c0_i32 : i32, i32
  }
  func.func @transform_1(%arg0: i32, %arg1: i32) -> (i32, i32) {
    %c0_i32 = arith.constant 0 : i32
    %c0_i32_0 = arith.constant 0 : i32
    %c0_i32_1 = arith.constant 0 : i32
    return %c0_i32, %c0_i32_0 : i32, i32
  }
  func.func @transform_2(%arg0: i32, %arg1: i32) -> (i32, i32) {
    %c0_i32 = arith.constant 0 : i32
    %c0_i32_0 = arith.constant 0 : i32
    %c0_i32_1 = arith.constant 0 : i32
    return %c0_i32, %c0_i32_0 : i32, i32
  }
  func.func @transform_3(%arg0: i32, %arg1: i32) -> (i32, i32) {
    %c0_i32 = arith.constant 0 : i32
    %c0_i32_0 = arith.constant 0 : i32
    return %c0_i32, %arg1 : i32, i32
  }
  func.func @transform_4(%arg0: i32, %arg1: i32) -> (i32, i32) {
    %c0_i32 = arith.constant 0 : i32
    %c0_i32_0 = arith.constant 0 : i32
    return %c0_i32, %arg1 : i32, i32
  }
  func.func @transform_5(%arg0: i32, %arg1: i32) -> (i32, i32) {
    %c0_i32 = arith.constant 0 : i32
    %c0_i32_0 = arith.constant 0 : i32
    return %arg1, %c0_i32 : i32, i32
  }
  func.func @transform_6(%arg0: i32, %arg1: i32) -> (i32, i32) {
    %c0_i32 = arith.constant 0 : i32
    %c0_i32_0 = arith.constant 0 : i32
    %c0_i32_1 = arith.constant 0 : i32
    return %c0_i32, %c0_i32_0 : i32, i32
  }
  func.func @transform_7(%arg0: i32, %arg1: i32) -> (i32, i32) {
    %c0_i32 = arith.constant 0 : i32
    %c0_i32_0 = arith.constant 0 : i32
    return %arg0, %c0_i32 : i32, i32
  }
}

</mosaic_0001>

<llo_original>
// kernel: tpu_custom_call.1
$region0: #{tpu_custom_call.1}
  #allocation0 [shape = 'u32[]', space=smem, size = 0x4, offset = 0x4, fixed_abs, tag = 'smem constant byte address 0x4 - core index']
  #allocation1 [shape = 'u32[72,128]{1,0:T(1,128)}', space=vmem, size = 0x9000, scoped, tag = 'internal scratch']
  #allocation2 [shape = 'bf16[128,128]{1,0:T(8,128)(2,1)}', space=vmem, size = 0x8000, scoped, tag = 'scratch operand']
  %s0 = inlined_call_operand.hbm [shape: f32[256,128], index: 0, kind: input, shape index: {}]
  %s1 = inlined_call_operand.hbm [shape: f32[1,128], index: 1, kind: input, shape index: {}]
  %s2 = inlined_call_operand.vmem [shape: f32[1,128], index: 2, kind: input, shape index: {}]
  %s3 = inlined_call_operand.hbm [shape: bf16[128,512], index: 3, kind: input, shape index: {}]
  %s4 = inlined_call_operand.hbm [shape: f32[1,512], index: 4, kind: input, shape index: {}]
  %s5 = inlined_call_operand.hbm [shape: bf16[512,128], index: 5, kind: input, shape index: {}]
  %s6 = inlined_call_operand.vmem [shape: f32[1,128], index: 6, kind: input, shape index: {}]
  %s7 = inlined_call_operand.hbm [shape: f32[256,128], index: 7, kind: output, shape index: {}]
  %s8 = sld [smem:[#allocation0]]
  $region85: #{tpu_custom_call.1} parent=0
    _
  %s10 = ssub.s32 1, %s8
  %s11 = scalar_select 0, %s10, %s8
  $region1: #{tpu_custom_call.1} parent=0
    #allocation3 [shape = 'u8[131072]{0}', space=vmem, size = 0x20000, scoped, tag = 'input window, operand 0']
    #allocation4 [shape = 's32[2]{0}', space=sflag, size = 0x8, scoped, tag = 'scoped memory for tpu_custom_call.1']
    #allocation5 [shape = 's32[2]{0}', space=sflag, size = 0x8, scoped, tag = 'scoped memory for tpu_custom_call.1']
    #allocation6 [shape = 'u8[512]{0}', space=vmem, size = 0x400, scoped, tag = 'input window, operand 1, single buffered']
    #allocation7 [shape = 's32[1]{0}', space=sflag, size = 0x4, scoped, tag = 'scoped memory for tpu_custom_call.1']
    #allocation8 [shape = 'u8[131072]{0}', space=vmem, size = 0x20000, scoped, tag = 'input window, operand 3, single buffered']
    #allocation9 [shape = 'u8[2048]{0}', space=vmem, size = 0x800, scoped, tag = 'input window, operand 4, single buffered']
    #allocation10 [shape = 's32[1]{0}', space=sflag, size = 0x4, scoped, tag = 'scoped memory for tpu_custom_call.1']
    #allocation11 [shape = 'u8[131072]{0}', space=vmem, size = 0x20000, scoped, tag = 'input window, operand 5, single buffered']
    #allocation12 [shape = 'u8[131072]{0}', space=vmem, size = 0x20000, scoped, tag = 'output window, operand 0']
    %12 = vsyncpa [#allocation4], 0
    %s13 = scalar_lea.sflag [#allocation4], 1
    %14 = vsyncpa %s13, 0
    %15 = vsyncpa [#allocation7], 0
    %16 = vsyncpa [#allocation10], 0
    %17 = vsyncpa [#allocation5], 0
    %s18 = scalar_lea.sflag [#allocation5], 1
    %19 = vsyncpa %s18, 0
    loop: start=0, step=1, limit=4
    $region2: #{tpu_custom_call.1} parent=1 // loop_pre_header
      _
    $region3: #{tpu_custom_call.1} parent=1 // loop_header
      %s21 = sphi 0, %s25
      %p22 = scmp.ge.s32.totalorder %s21, 4
      %s28 = sphi 0, %s40
      %s29 = sphi 0, %s36
      %s30 = sphi 0, %s28
      %s31 = sphi 0, %s29
      %s32 = sphi 0, %s30
      %s33 = sphi 0, %s31
      %s43 = sphi 0, %s45
      %s46 = sphi 0, %s43
      %s47 = sphi 0, %s46
      %s63 = sphi 0, %s47
      %s67 = sphi 0, %s67
      %s69 = sphi 0, %s67
      %s70 = sphi 0, %s69
      %s84 = sphi 0, %s70
      %s88 = sphi 0, %s88
      %s90 = sphi 0, %s88
      %s91 = sphi 0, %s90
      %s105 = sphi 0, %s91
      %s111 = sphi 0, %s113
      %s114 = sphi 0, %s111
      %s115 = sphi 0, %s114
      %s131 = sphi 0, %s115
      %s137 = sphi 0, %s139
      %s140 = sphi 0, %s137
      %s141 = sphi 0, %s140
      %s157 = sphi 0, %s141
      %s163 = sphi 0, %s165
      %s166 = sphi 0, %s163
      %s167 = sphi 0, %s166
      %s183 = sphi 0, %s167
      %s187 = sphi 0, %s187
      %s189 = sphi 0, %s187
      %s190 = sphi 0, %s189
      %s204 = sphi 0, %s190
      %s210 = sphi 0, %s212
      %s213 = sphi 0, %s210
      %s214 = sphi 0, %s213
      %s230 = sphi 0, %s214
    $region4: #{tpu_custom_call.1} parent=1 // loop_header_branch
      %24 = sbr.rel (%p22) target = $region8
    $region5: #{tpu_custom_call.1} parent=1 // loop_body
      %s26 = ssub.s32 %s21, 1
      %s27 = ssub.s32 %s21, 2
      %s34 = sadd.s32 1, %s29
      %p35 = scmp.ge.s32.totalorder %s34, 1
      %s36 = scalar_select %p35, 0, %s34
      %s37 = sadd.s32 1, %s28
      %s38 = scalar_select %p35, %s37, %s28
      %p39 = scmp.ge.s32.totalorder %s38, 2
      %s40 = scalar_select %p39, 0, %s38
      %s41 = ssub.s32 %s28, %s40
      %p42 = scmp.eq.s32.totalorder %s41, 0
      %s44 = sadd.s32 %s43, 1
      %s45 = scalar_select %p42, %s43, %s44
      %p48 = pneg %p42
      %p49 = scmp.eq.s32.totalorder %s21, 1
      %p50 = por %p48, %p49
      %p51 = scmp.ne.s32.totalorder %s43, %s46
      %p52 = scmp.eq.s32.totalorder %s21, 0
      %p53 = por %p51, %p52
      %p54 = scmp.ne.s32.totalorder %s43, %s46
      %p55 = scmp.eq.s32.totalorder %s26, 1
      %p56 = por %p54, %p55
      %p57 = scmp.ne.s32.totalorder %s46, %s47
      %p58 = scmp.eq.s32.totalorder %s26, 0
      %p59 = por %p57, %p58
      %p60 = scmp.ne.s32.totalorder %s46, %s47
      %p61 = scmp.eq.s32.totalorder %s27, 1
      %p62 = por %p60, %p61
      %p64 = scmp.ne.s32.totalorder %s47, %s63
      %p65 = scmp.eq.s32.totalorder %s27, 0
      %p66 = por %p64, %p65
      %s68 = sadd.s32 %s67, 1
      %p71 = scmp.eq.s32.totalorder %s21, 1
      %p72 = scmp.ne.s32.totalorder %s67, %s69
      %p73 = scmp.eq.s32.totalorder %s21, 0
      %p74 = por %p72, %p73
      %p75 = scmp.ne.s32.totalorder %s67, %s69
      %p76 = scmp.eq.s32.totalorder %s26, 1
      %p77 = por %p75, %p76
      %p78 = scmp.ne.s32.totalorder %s69, %s70
      %p79 = scmp.eq.s32.totalorder %s26, 0
      %p80 = por %p78, %p79
      %p81 = scmp.ne.s32.totalorder %s69, %s70
      %p82 = scmp.eq.s32.totalorder %s27, 1
      %p83 = por %p81, %p82
      %p85 = scmp.ne.s32.totalorder %s70, %s84
      %p86 = scmp.eq.s32.totalorder %s27, 0
      %p87 = por %p85, %p86
      %s89 = sadd.s32 %s88, 1
      %p92 = scmp.eq.s32.totalorder %s21, 1
      %p93 = scmp.ne.s32.totalorder %s88, %s90
      %p94 = scmp.eq.s32.totalorder %s21, 0
      %p95 = por %p93, %p94
      %p96 = scmp.ne.s32.totalorder %s88, %s90
      %p97 = scmp.eq.s32.totalorder %s26, 1
      %p98 = por %p96, %p97
      %p99 = scmp.ne.s32.totalorder %s90, %s91
      %p100 = scmp.eq.s32.totalorder %s26, 0
      %p101 = por %p99, %p100
      %p102 = scmp.ne.s32.totalorder %s90, %s91
      %p103 = scmp.eq.s32.totalorder %s27, 1
      %p104 = por %p102, %p103
      %p106 = scmp.ne.s32.totalorder %s91, %s105
      %p107 = scmp.eq.s32.totalorder %s27, 0
      %p108 = por %p106, %p107
      %s109 = ssub.s32 %s29, %s36
      %p110 = scmp.eq.s32.totalorder %s109, 0
      %s112 = sadd.s32 %s111, 1
      %s113 = scalar_select %p110, %s111, %s112
      %p116 = pneg %p110
      %p117 = scmp.eq.s32.totalorder %s21, 1
      %p118 = por %p116, %p117
      %p119 = scmp.ne.s32.totalorder %s111, %s114
      %p120 = scmp.eq.s32.totalorder %s21, 0
      %p121 = por %p119, %p120
      %p122 = scmp.ne.s32.totalorder %s111, %s114
      %p123 = scmp.eq.s32.totalorder %s26, 1
      %p124 = por %p122, %p123
      %p125 = scmp.ne.s32.totalorder %s114, %s115
      %p126 = scmp.eq.s32.totalorder %s26, 0
      %p127 = por %p125, %p126
      %p128 = scmp.ne.s32.totalorder %s114, %s115
      %p129 = scmp.eq.s32.totalorder %s27, 1
      %p130 = por %p128, %p129
      %p132 = scmp.ne.s32.totalorder %s115, %s131
      %p133 = scmp.eq.s32.totalorder %s27, 0
      %p134 = por %p132, %p133
      %s135 = ssub.s32 %s29, %s36
      %p136 = scmp.eq.s32.totalorder %s135, 0
      %s138 = sadd.s32 %s137, 1
      %s139 = scalar_select %p136, %s137, %s138
      %p142 = pneg %p136
      %p143 = scmp.eq.s32.totalorder %s21, 1
      %p144 = por %p142, %p143
      %p145 = scmp.ne.s32.totalorder %s137, %s140
      %p146 = scmp.eq.s32.totalorder %s21, 0
      %p147 = por %p145, %p146
      %p148 = scmp.ne.s32.totalorder %s137, %s140
      %p149 = scmp.eq.s32.totalorder %s26, 1
      %p150 = por %p148, %p149
      %p151 = scmp.ne.s32.totalorder %s140, %s141
      %p152 = scmp.eq.s32.totalorder %s26, 0
      %p153 = por %p151, %p152
      %p154 = scmp.ne.s32.totalorder %s140, %s141
      %p155 = scmp.eq.s32.totalorder %s27, 1
      %p156 = por %p154, %p155
      %p158 = scmp.ne.s32.totalorder %s141, %s157
      %p159 = scmp.eq.s32.totalorder %s27, 0
      %p160 = por %p158, %p159
      %s161 = ssub.s32 %s29, %s36
      %p162 = scmp.eq.s32.totalorder %s161, 0
      %s164 = sadd.s32 %s163, 1
      %s165 = scalar_select %p162, %s163, %s164
      %p168 = pneg %p162
      %p169 = scmp.eq.s32.totalorder %s21, 1
      %p170 = por %p168, %p169
      %p171 = scmp.ne.s32.totalorder %s163, %s166
      %p172 = scmp.eq.s32.totalorder %s21, 0
      %p173 = por %p171, %p172
      %p174 = scmp.ne.s32.totalorder %s163, %s166
      %p175 = scmp.eq.s32.totalorder %s26, 1
      %p176 = por %p174, %p175
      %p177 = scmp.ne.s32.totalorder %s166, %s167
      %p178 = scmp.eq.s32.totalorder %s26, 0
      %p179 = por %p177, %p178
      %p180 = scmp.ne.s32.totalorder %s166, %s167
      %p181 = scmp.eq.s32.totalorder %s27, 1
      %p182 = por %p180, %p181
      %p184 = scmp.ne.s32.totalorder %s167, %s183
      %p185 = scmp.eq.s32.totalorder %s27, 0
      %p186 = por %p184, %p185
      %s188 = sadd.s32 %s187, 1
      %p191 = scmp.eq.s32.totalorder %s21, 1
      %p192 = scmp.ne.s32.totalorder %s187, %s189
      %p193 = scmp.eq.s32.totalorder %s21, 0
      %p194 = por %p192, %p193
      %p195 = scmp.ne.s32.totalorder %s187, %s189
      %p196 = scmp.eq.s32.totalorder %s26, 1
      %p197 = por %p195, %p196
      %p198 = scmp.ne.s32.totalorder %s189, %s190
      %p199 = scmp.eq.s32.totalorder %s26, 0
      %p200 = por %p198, %p199
      %p201 = scmp.ne.s32.totalorder %s189, %s190
      %p202 = scmp.eq.s32.totalorder %s27, 1
      %p203 = por %p201, %p202
      %p205 = scmp.ne.s32.totalorder %s190, %s204
      %p206 = scmp.eq.s32.totalorder %s27, 0
      %p207 = por %p205, %p206
      %s208 = ssub.s32 %s28, %s40
      %p209 = scmp.eq.s32.totalorder %s208, 0
      %s211 = sadd.s32 %s210, 1
      %s212 = scalar_select %p209, %s210, %s211
      %p215 = pneg %p209
      %p216 = scmp.eq.s32.totalorder %s21, 1
      %p217 = por %p215, %p216
      %p218 = scmp.ne.s32.totalorder %s210, %s213
      %p219 = scmp.eq.s32.totalorder %s21, 0
      %p220 = por %p218, %p219
      %p221 = scmp.ne.s32.totalorder %s210, %s213
      %p222 = scmp.eq.s32.totalorder %s26, 1
      %p223 = por %p221, %p222
      %p224 = scmp.ne.s32.totalorder %s213, %s214
      %p225 = scmp.eq.s32.totalorder %s26, 0
      %p226 = por %p224, %p225
      %p227 = scmp.ne.s32.totalorder %s213, %s214
      %p228 = scmp.eq.s32.totalorder %s27, 1
      %p229 = por %p227, %p228
      %p231 = scmp.ne.s32.totalorder %s214, %s230
      %p232 = scmp.eq.s32.totalorder %s27, 0
      %p233 = por %p231, %p232
      %p234 = scmp.le.s32.totalorder 1, %s21
      %p235 = scmp.lt.s32.totalorder %s21, 3
      %p236 = pnand %p234, %p235
      %p237 = pneg %p236
      // Predicated region
      $region9: #{tpu_custom_call.1} parent=5 // pred_check
        _
      $region10: #{tpu_custom_call.1} parent=5 // pred_check_branch
        %239 = sbr.rel (%p236) target = $region12
      $region11: #{tpu_custom_call.1} parent=5 // pred_region
        %s240 = ssub.s32 %s21, 1
        // Predicated region
        $region13: #{tpu_custom_call.1} parent=11 // pred_check
          %p241 = pneg %p80
        $region14: #{tpu_custom_call.1} parent=11 // pred_check_branch
          %243 = sbr.rel (%p241) target = $region16
        $region15: #{tpu_custom_call.1} parent=11 // pred_region
          %245 = vsyncadd [#allocation7], 0
          %s247 = sshll.u32 %s1, 4
          %s248 = int_to_ptr.hbm [resolvable:$true] %s247
          %s249 = sshll.u32 [#allocation6], 4
          %s250 = int_to_ptr.vmem [resolvable:$true] %s249
          %252 = dma.hbm_to_vmem [thread:$0]  %s248, 16, %s250, [#allocation7]
        $region16: #{tpu_custom_call.1} parent=11 // pred_fallthru
          _
        // Predicated region
        $region17: #{tpu_custom_call.1} parent=11 // pred_check
          %p253 = pneg %p101
        $region18: #{tpu_custom_call.1} parent=11 // pred_check_branch
          %255 = sbr.rel (%p253) target = $region20
        $region19: #{tpu_custom_call.1} parent=11 // pred_region
          _
        $region20: #{tpu_custom_call.1} parent=11 // pred_fallthru
          _
        // Predicated region
        $region21: #{tpu_custom_call.1} parent=11 // pred_check
          %p256 = pneg %p127
        $region22: #{tpu_custom_call.1} parent=11 // pred_check_branch
          %258 = sbr.rel (%p256) target = $region24
        $region23: #{tpu_custom_call.1} parent=11 // pred_region
          %s259 = smul.u32 4, %s31
          %261 = vsyncadd [#allocation7], 0
          %s262 = smul.addr %s259, 4
          %s263 = scalar_lea.hbm %s3, %s262
          %s264 = sshll.u32 %s263, 4
          %s265 = int_to_ptr.hbm [resolvable:$true] %s264
          %s266 = sshll.u32 [#allocation8], 4
          %s267 = int_to_ptr.vmem [resolvable:$true] %s266
          %272 = dma.hbm_to_vmem [thread:$0]  %s265, 4096, %s267, [#allocation7], 256, 256, 16
        $region24: #{tpu_custom_call.1} parent=11 // pred_fallthru
          _
        // Predicated region
        $region25: #{tpu_custom_call.1} parent=11 // pred_check
          %p273 = pneg %p153
        $region26: #{tpu_custom_call.1} parent=11 // pred_check_branch
          %275 = sbr.rel (%p273) target = $region28
        $region27: #{tpu_custom_call.1} parent=11 // pred_region
          %s276 = smul.u32 4, %s31
          %278 = vsyncadd [#allocation10], 0
          %s279 = scalar_lea.hbm %s4, %s276
          %s281 = sshll.u32 %s279, 4
          %s282 = int_to_ptr.hbm [resolvable:$true] %s281
          %s283 = sshll.u32 [#allocation9], 4
          %s284 = int_to_ptr.vmem [resolvable:$true] %s283
          %286 = dma.hbm_to_vmem [thread:$0]  %s282, 64, %s284, [#allocation10]
        $region28: #{tpu_custom_call.1} parent=11 // pred_fallthru
          _
        // Predicated region
        $region29: #{tpu_custom_call.1} parent=11 // pred_check
          %p287 = pneg %p179
        $region30: #{tpu_custom_call.1} parent=11 // pred_check_branch
          %289 = sbr.rel (%p287) target = $region32
        $region31: #{tpu_custom_call.1} parent=11 // pred_region
          %s290 = smul.u32 64, %s31
          %292 = vsyncadd [#allocation10], 0
          %s293 = smul.addr %s290, 4
          %s294 = scalar_lea.hbm %s5, %s293
          %s295 = sshll.u32 %s294, 4
          %s296 = int_to_ptr.hbm [resolvable:$true] %s295
          %s297 = sshll.u32 [#allocation11], 4
          %s298 = int_to_ptr.vmem [resolvable:$true] %s297
          %303 = dma.hbm_to_vmem [thread:$0]  %s296, 4096, %s298, [#allocation10], 64, 64, 4
        $region32: #{tpu_custom_call.1} parent=11 // pred_fallthru
          _
        // Predicated region
        $region33: #{tpu_custom_call.1} parent=11 // pred_check
          %p304 = pneg %p200
        $region34: #{tpu_custom_call.1} parent=11 // pred_check_branch
          %306 = sbr.rel (%p304) target = $region36
        $region35: #{tpu_custom_call.1} parent=11 // pred_region
          _
        $region36: #{tpu_custom_call.1} parent=11 // pred_fallthru
          _
      $region12: #{tpu_custom_call.1} parent=5 // pred_fallthru
        _
      %p307 = scmp.lt.s32.totalorder %s21, 2
      // Predicated region
      $region37: #{tpu_custom_call.1} parent=5 // pred_check
        %p308 = pneg %p307
      $region38: #{tpu_custom_call.1} parent=5 // pred_check_branch
        %310 = sbr.rel (%p308) target = $region40
      $region39: #{tpu_custom_call.1} parent=5 // pred_region
        // Predicated region
        $region41: #{tpu_custom_call.1} parent=39 // pred_check
          %p311 = pneg %p53
        $region42: #{tpu_custom_call.1} parent=39 // pred_check_branch
          %313 = sbr.rel (%p311) target = $region44
        $region43: #{tpu_custom_call.1} parent=39 // pred_region
          %s314 = sand.u32 %s43, 1
          %s315 = scalar_lea.sflag [#allocation4], %s314
          %s316 = sand.u32 %s43, 1
          %s317 = smul.addr %s316, 128
          %s318 = scalar_lea.vmem [#allocation3], %s317
          %s319 = smul.u32 16, %s28
          %321 = vsyncadd %s315, 0
          %s322 = smul.addr %s319, 8
          %s323 = scalar_lea.hbm %s0, %s322
          %s324 = sshll.u32 %s323, 4
          %s325 = int_to_ptr.hbm [resolvable:$true] %s324
          %s326 = sshll.u32 %s318, 4
          %s327 = int_to_ptr.vmem [resolvable:$true] %s326
          %332 = dma.hbm_to_vmem [thread:$0]  %s325, 2048, %s327, %s315, 128, 128, 8
        $region44: #{tpu_custom_call.1} parent=39 // pred_fallthru
          _
      $region40: #{tpu_custom_call.1} parent=5 // pred_fallthru
        _
      %p333 = scmp.le.s32.totalorder 1, %s21
      %p334 = scmp.lt.s32.totalorder %s21, 3
      %p335 = pnand %p333, %p334
      %p336 = pneg %p335
      // Predicated region
      $region45: #{tpu_custom_call.1} parent=5 // pred_check
        _
      $region46: #{tpu_custom_call.1} parent=5 // pred_check_branch
        %338 = sbr.rel (%p335) target = $region48
      $region47: #{tpu_custom_call.1} parent=5 // pred_region
        %s339 = ssub.s32 %s21, 1
        %s340 = sand.u32 %s46, 1
        %s341 = scalar_lea.sflag [#allocation4], %s340
        %s342 = sand.u32 %s46, 1
        %s343 = smul.addr %s342, 128
        %s344 = scalar_lea.vmem [#allocation3], %s343
        // Predicated region
        $region49: #{tpu_custom_call.1} parent=47 // pred_check
          %p345 = pneg %p59
        $region50: #{tpu_custom_call.1} parent=47 // pred_check_branch
          %347 = sbr.rel (%p345) target = $region52
        $region51: #{tpu_custom_call.1} parent=47 // pred_region
          %349 = dma.done %s341, 2048
        $region52: #{tpu_custom_call.1} parent=47 // pred_fallthru
          _
        // Predicated region
        $region53: #{tpu_custom_call.1} parent=47 // pred_check
          %p350 = pneg %p80
        $region54: #{tpu_custom_call.1} parent=47 // pred_check_branch
          %352 = sbr.rel (%p350) target = $region56
        $region55: #{tpu_custom_call.1} parent=47 // pred_region
          %354 = dma.done [#allocation7], 16
        $region56: #{tpu_custom_call.1} parent=47 // pred_fallthru
          _
        // Predicated region
        $region57: #{tpu_custom_call.1} parent=47 // pred_check
          %p355 = pneg %p127
        $region58: #{tpu_custom_call.1} parent=47 // pred_check_branch
          %357 = sbr.rel (%p355) target = $region60
        $region59: #{tpu_custom_call.1} parent=47 // pred_region
          %359 = dma.done [#allocation7], 4096
        $region60: #{tpu_custom_call.1} parent=47 // pred_fallthru
          _
        // Predicated region
        $region61: #{tpu_custom_call.1} parent=47 // pred_check
          %p360 = pneg %p153
        $region62: #{tpu_custom_call.1} parent=47 // pred_check_branch
          %362 = sbr.rel (%p360) target = $region64
        $region63: #{tpu_custom_call.1} parent=47 // pred_region
          %364 = dma.done [#allocation10], 64
        $region64: #{tpu_custom_call.1} parent=47 // pred_fallthru
          _
        // Predicated region
        $region65: #{tpu_custom_call.1} parent=47 // pred_check
          %p365 = pneg %p179
        $region66: #{tpu_custom_call.1} parent=47 // pred_check_branch
          %367 = sbr.rel (%p365) target = $region68
        $region67: #{tpu_custom_call.1} parent=47 // pred_region
          %369 = dma.done [#allocation10], 4096
        $region68: #{tpu_custom_call.1} parent=47 // pred_fallthru
          _
        %s370 = sand.u32 %s46, 1
        %s371 = scalar_lea.sflag [#allocation4], %s370
        %s372 = sand.u32 %s46, 1
        %s373 = smul.addr %s372, 128
        %s374 = scalar_lea.vmem [#allocation3], %s373
        %p375 = pneg %p59
        %p376 = pneg %p56
        %p377 = pneg %p80
        %p378 = pneg %p77
        %p379 = pneg %p101
        %p380 = pneg %p98
        %p381 = pneg %p127
        %p382 = pneg %p124
        %p383 = pneg %p153
        %p384 = pneg %p150
        %p385 = pneg %p179
        %p386 = pneg %p176
        %p387 = pneg %p200
        %p388 = pneg %p197
        %p389 = pneg %p226
        %p390 = pneg %p223
        %s391 = sand.u32 %s213, 1
        %s392 = scalar_lea.sflag [#allocation5], %s391
        %s393 = sand.u32 %s213, 1
        %s394 = smul.addr %s393, 128
        %s395 = scalar_lea.vmem [#allocation12], %s394
        %s396 = smul.u32 16, %s30
        %s397 = smul.u32 4, %s31
        %s398 = smul.u32 4, %s31
        %s399 = smul.u32 64, %s31
        %s400 = smul.u32 16, %s30
        %p401 = scmp.eq.s32.totalorder %s31, 0
        // Predicated region
        $region69: #{tpu_custom_call.1} parent=47 // pred_check
          %p402 = pneg %p401
        $region70: #{tpu_custom_call.1} parent=47 // pred_check_branch
          %404 = sbr.rel (%p402) target = $region72
        $region71: #{tpu_custom_call.1} parent=47 // pred_region
          %v405 = vld [vmem:[%s344] sm:$0xff]
          %v406 = vld [vmem:[%s344 + $0x8] sm:$0xff]
          %v407 = vld [vmem:[%s344 + $0x10] sm:$0xff]
          %v408 = vld [vmem:[%s344 + $0x18] sm:$0xff]
          %v409 = vld [vmem:[%s344 + $0x20] sm:$0xff]
          %v410 = vld [vmem:[%s344 + $0x28] sm:$0xff]
          %v411 = vld [vmem:[%s344 + $0x30] sm:$0xff]
          %v412 = vld [vmem:[%s344 + $0x38] sm:$0xff]
          %v413 = vld [vmem:[%s344 + $0x40] sm:$0xff]
          %v414 = vld [vmem:[%s344 + $0x48] sm:$0xff]
          %v415 = vld [vmem:[%s344 + $0x50] sm:$0xff]
          %v416 = vld [vmem:[%s344 + $0x58] sm:$0xff]
          %v417 = vld [vmem:[%s344 + $0x60] sm:$0xff]
          %v418 = vld [vmem:[%s344 + $0x68] sm:$0xff]
          %v419 = vld [vmem:[%s344 + $0x70] sm:$0xff]
          %v420 = vld [vmem:[%s344 + $0x78] sm:$0xff]
          %421 = vadd.xlane.f32.xlu0 %v405
          %v422 = vpop.xlane.xlu0 %421
          %423 = vadd.xlane.f32.xlu0 %v406
          %v424 = vpop.xlane.xlu0 %423
          %425 = vadd.xlane.f32.xlu0 %v407
          %v426 = vpop.xlane.xlu0 %425
          %427 = vadd.xlane.f32.xlu0 %v408
          %v428 = vpop.xlane.xlu0 %427
          %429 = vadd.xlane.f32.xlu0 %v409
          %v430 = vpop.xlane.xlu0 %429
          %431 = vadd.xlane.f32.xlu0 %v410
          %v432 = vpop.xlane.xlu0 %431
          %433 = vadd.xlane.f32.xlu0 %v411
          %v434 = vpop.xlane.xlu0 %433
          %435 = vadd.xlane.f32.xlu0 %v412
          %v436 = vpop.xlane.xlu0 %435
          %437 = vadd.xlane.f32.xlu0 %v413
          %v438 = vpop.xlane.xlu0 %437
          %439 = vadd.xlane.f32.xlu0 %v414
          %v440 = vpop.xlane.xlu0 %439
          %441 = vadd.xlane.f32.xlu0 %v415
          %v442 = vpop.xlane.xlu0 %441
          %443 = vadd.xlane.f32.xlu0 %v416
          %v444 = vpop.xlane.xlu0 %443
          %445 = vadd.xlane.f32.xlu0 %v417
          %v446 = vpop.xlane.xlu0 %445
          %447 = vadd.xlane.f32.xlu0 %v418
          %v448 = vpop.xlane.xlu0 %447
          %449 = vadd.xlane.f32.xlu0 %v419
          %v450 = vpop.xlane.xlu0 %449
          %451 = vadd.xlane.f32.xlu0 %v420
          %v452 = vpop.xlane.xlu0 %451
          %v453 = vrcp.pop 128.0
          %v454 = vmul.f32 128.0, %v453
          %v455 = vsub.f32 1.0, %v454
          %v456 = vmul.f32 %v453, %v455
          %v457 = vadd.f32 %v453, %v456
          %vm458 = vweird.f32 %v453
          %v459 = vsel %vm458, %v453, %v457
          %v460 = vmul.f32 %v422, %v459
          %v461 = vmul.f32 %v424, %v459
          %v462 = vmul.f32 %v426, %v459
          %v463 = vmul.f32 %v428, %v459
          %v464 = vmul.f32 %v430, %v459
          %v465 = vmul.f32 %v432, %v459
          %v466 = vmul.f32 %v434, %v459
          %v467 = vmul.f32 %v436, %v459
          %v468 = vmul.f32 %v438, %v459
          %v469 = vmul.f32 %v440, %v459
          %v470 = vmul.f32 %v442, %v459
          %v471 = vmul.f32 %v444, %v459
          %v472 = vmul.f32 %v446, %v459
          %v473 = vmul.f32 %v448, %v459
          %v474 = vmul.f32 %v450, %v459
          %v475 = vmul.f32 %v452, %v459
          %v476 = vsub.f32 %v405, %v460
          %v477 = vsub.f32 %v406, %v461
          %v478 = vsub.f32 %v407, %v462
          %v479 = vsub.f32 %v408, %v463
          %v480 = vsub.f32 %v409, %v464
          %v481 = vsub.f32 %v410, %v465
          %v482 = vsub.f32 %v411, %v466
          %v483 = vsub.f32 %v412, %v467
          %v484 = vsub.f32 %v413, %v468
          %v485 = vsub.f32 %v414, %v469
          %v486 = vsub.f32 %v415, %v470
          %v487 = vsub.f32 %v416, %v471
          %v488 = vsub.f32 %v417, %v472
          %v489 = vsub.f32 %v418, %v473
          %v490 = vsub.f32 %v419, %v474
          %v491 = vsub.f32 %v420, %v475
          %v492 = vmul.f32 %v476, %v476
          %v493 = vmul.f32 %v477, %v477
          %v494 = vmul.f32 %v478, %v478
          %v495 = vmul.f32 %v479, %v479
          %v496 = vmul.f32 %v480, %v480
          %v497 = vmul.f32 %v481, %v481
          %v498 = vmul.f32 %v482, %v482
          %v499 = vmul.f32 %v483, %v483
          %v500 = vmul.f32 %v484, %v484
          %v501 = vmul.f32 %v485, %v485
          %v502 = vmul.f32 %v486, %v486
          %v503 = vmul.f32 %v487, %v487
          %v504 = vmul.f32 %v488, %v488
          %v505 = vmul.f32 %v489, %v489
          %v506 = vmul.f32 %v490, %v490
          %v507 = vmul.f32 %v491, %v491
          %508 = vadd.xlane.f32.xlu0 %v492
          %v509 = vpop.xlane.xlu0 %508
          %510 = vadd.xlane.f32.xlu0 %v493
          %v511 = vpop.xlane.xlu0 %510
          %512 = vadd.xlane.f32.xlu0 %v494
          %v513 = vpop.xlane.xlu0 %512
          %514 = vadd.xlane.f32.xlu0 %v495
          %v515 = vpop.xlane.xlu0 %514
          %516 = vadd.xlane.f32.xlu0 %v496
          %v517 = vpop.xlane.xlu0 %516
          %518 = vadd.xlane.f32.xlu0 %v497
          %v519 = vpop.xlane.xlu0 %518
          %520 = vadd.xlane.f32.xlu0 %v498
          %v521 = vpop.xlane.xlu0 %520
          %522 = vadd.xlane.f32.xlu0 %v499
          %v523 = vpop.xlane.xlu0 %522
          %524 = vadd.xlane.f32.xlu0 %v500
          %v525 = vpop.xlane.xlu0 %524
          %526 = vadd.xlane.f32.xlu0 %v501
          %v527 = vpop.xlane.xlu0 %526
          %528 = vadd.xlane.f32.xlu0 %v502
          %v529 = vpop.xlane.xlu0 %528
          %530 = vadd.xlane.f32.xlu0 %v503
          %v531 = vpop.xlane.xlu0 %530
          %532 = vadd.xlane.f32.xlu0 %v504
          %v533 = vpop.xlane.xlu0 %532
          %534 = vadd.xlane.f32.xlu0 %v505
          %v535 = vpop.xlane.xlu0 %534
          %536 = vadd.xlane.f32.xlu0 %v506
          %v537 = vpop.xlane.xlu0 %536
          %538 = vadd.xlane.f32.xlu0 %v507
          %v539 = vpop.xlane.xlu0 %538
          %v540 = vmul.f32 %v509, %v459
          %v541 = vmul.f32 %v511, %v459
          %v542 = vmul.f32 %v513, %v459
          %v543 = vmul.f32 %v515, %v459
          %v544 = vmul.f32 %v517, %v459
          %v545 = vmul.f32 %v519, %v459
          %v546 = vmul.f32 %v521, %v459
          %v547 = vmul.f32 %v523, %v459
          %v548 = vmul.f32 %v525, %v459
          %v549 = vmul.f32 %v527, %v459
          %v550 = vmul.f32 %v529, %v459
          %v551 = vmul.f32 %v531, %v459
          %v552 = vmul.f32 %v533, %v459
          %v553 = vmul.f32 %v535, %v459
          %v554 = vmul.f32 %v537, %v459
          %v555 = vmul.f32 %v539, %v459
          %v556 = vadd.f32 %v540, 1e-06
          %v557 = vadd.f32 %v541, 1e-06
          %v558 = vadd.f32 %v542, 1e-06
          %v559 = vadd.f32 %v543, 1e-06
          %v560 = vadd.f32 %v544, 1e-06
          %v561 = vadd.f32 %v545, 1e-06
          %v562 = vadd.f32 %v546, 1e-06
          %v563 = vadd.f32 %v547, 1e-06
          %v564 = vadd.f32 %v548, 1e-06
          %v565 = vadd.f32 %v549, 1e-06
          %v566 = vadd.f32 %v550, 1e-06
          %v567 = vadd.f32 %v551, 1e-06
          %v568 = vadd.f32 %v552, 1e-06
          %v569 = vadd.f32 %v553, 1e-06
          %v570 = vadd.f32 %v554, 1e-06
          %v571 = vadd.f32 %v555, 1e-06
          %v572 = vrsqrt.pop %v556
          %v573 = vmul.f32 %v572, %v556
          %v574 = vmul.f32 %v573, %v572
          %v575 = vmul.f32 0.5, %v574
          %v576 = vsub.f32 1.5, %v575
          %v577 = vmul.f32 %v572, %v576
          %vm578 = vweird.f32 %v556
          %vm579 = vweird.f32 %v572
          %vm580 = vmor %vm578, %vm579
          %v581 = vsel %vm580, %v572, %v577
          %v582 = vrsqrt.pop %v557
          %v583 = vmul.f32 %v582, %v557
          %v584 = vmul.f32 %v583, %v582
          %v585 = vmul.f32 0.5, %v584
          %v586 = vsub.f32 1.5, %v585
          %v587 = vmul.f32 %v582, %v586
          %vm588 = vweird.f32 %v557
          %vm589 = vweird.f32 %v582
          %vm590 = vmor %vm588, %vm589
          %v591 = vsel %vm590, %v582, %v587
          %v592 = vrsqrt.pop %v558
          %v593 = vmul.f32 %v592, %v558
          %v594 = vmul.f32 %v593, %v592
          %v595 = vmul.f32 0.5, %v594
          %v596 = vsub.f32 1.5, %v595
          %v597 = vmul.f32 %v592, %v596
          %vm598 = vweird.f32 %v558
          %vm599 = vweird.f32 %v592
          %vm600 = vmor %vm598, %vm599
          %v601 = vsel %vm600, %v592, %v597
          %v602 = vrsqrt.pop %v559
          %v603 = vmul.f32 %v602, %v559
          %v604 = vmul.f32 %v603, %v602
          %v605 = vmul.f32 0.5, %v604
          %v606 = vsub.f32 1.5, %v605
          %v607 = vmul.f32 %v602, %v606
          %vm608 = vweird.f32 %v559
          %vm609 = vweird.f32 %v602
          %vm610 = vmor %vm608, %vm609
          %v611 = vsel %vm610, %v602, %v607
          %v612 = vrsqrt.pop %v560
          %v613 = vmul.f32 %v612, %v560
          %v614 = vmul.f32 %v613, %v612
          %v615 = vmul.f32 0.5, %v614
          %v616 = vsub.f32 1.5, %v615
          %v617 = vmul.f32 %v612, %v616
          %vm618 = vweird.f32 %v560
          %vm619 = vweird.f32 %v612
          %vm620 = vmor %vm618, %vm619
          %v621 = vsel %vm620, %v612, %v617
          %v622 = vrsqrt.pop %v561
          %v623 = vmul.f32 %v622, %v561
          %v624 = vmul.f32 %v623, %v622
          %v625 = vmul.f32 0.5, %v624
          %v626 = vsub.f32 1.5, %v625
          %v627 = vmul.f32 %v622, %v626
          %vm628 = vweird.f32 %v561
          %vm629 = vweird.f32 %v622
          %vm630 = vmor %vm628, %vm629
          %v631 = vsel %vm630, %v622, %v627
          %v632 = vrsqrt.pop %v562
          %v633 = vmul.f32 %v632, %v562
          %v634 = vmul.f32 %v633, %v632
          %v635 = vmul.f32 0.5, %v634
          %v636 = vsub.f32 1.5, %v635
          %v637 = vmul.f32 %v632, %v636
          %vm638 = vweird.f32 %v562
          %vm639 = vweird.f32 %v632
          %vm640 = vmor %vm638, %vm639
          %v641 = vsel %vm640, %v632, %v637
          %v642 = vrsqrt.pop %v563
          %v643 = vmul.f32 %v642, %v563
          %v644 = vmul.f32 %v643, %v642
          %v645 = vmul.f32 0.5, %v644
          %v646 = vsub.f32 1.5, %v645
          %v647 = vmul.f32 %v642, %v646
          %vm648 = vweird.f32 %v563
          %vm649 = vweird.f32 %v642
          %vm650 = vmor %vm648, %vm649
          %v651 = vsel %vm650, %v642, %v647
          %v652 = vrsqrt.pop %v564
          %v653 = vmul.f32 %v652, %v564
          %v654 = vmul.f32 %v653, %v652
          %v655 = vmul.f32 0.5, %v654
          %v656 = vsub.f32 1.5, %v655
          %v657 = vmul.f32 %v652, %v656
          %vm658 = vweird.f32 %v564
          %vm659 = vweird.f32 %v652
          %vm660 = vmor %vm658, %vm659
          %v661 = vsel %vm660, %v652, %v657
          %v662 = vrsqrt.pop %v565
          %v663 = vmul.f32 %v662, %v565
          %v664 = vmul.f32 %v663, %v662
          %v665 = vmul.f32 0.5, %v664
          %v666 = vsub.f32 1.5, %v665
          %v667 = vmul.f32 %v662, %v666
          %vm668 = vweird.f32 %v565
          %vm669 = vweird.f32 %v662
          %vm670 = vmor %vm668, %vm669
          %v671 = vsel %vm670, %v662, %v667
          %v672 = vrsqrt.pop %v566
          %v673 = vmul.f32 %v672, %v566
          %v674 = vmul.f32 %v673, %v672
          %v675 = vmul.f32 0.5, %v674
          %v676 = vsub.f32 1.5, %v675
          %v677 = vmul.f32 %v672, %v676
          %vm678 = vweird.f32 %v566
          %vm679 = vweird.f32 %v672
          %vm680 = vmor %vm678, %vm679
          %v681 = vsel %vm680, %v672, %v677
          %v682 = vrsqrt.pop %v567
          %v683 = vmul.f32 %v682, %v567
          %v684 = vmul.f32 %v683, %v682
          %v685 = vmul.f32 0.5, %v684
          %v686 = vsub.f32 1.5, %v685
          %v687 = vmul.f32 %v682, %v686
          %vm688 = vweird.f32 %v567
          %vm689 = vweird.f32 %v682
          %vm690 = vmor %vm688, %vm689
          %v691 = vsel %vm690, %v682, %v687
          %v692 = vrsqrt.pop %v568
          %v693 = vmul.f32 %v692, %v568
          %v694 = vmul.f32 %v693, %v692
          %v695 = vmul.f32 0.5, %v694
          %v696 = vsub.f32 1.5, %v695
          %v697 = vmul.f32 %v692, %v696
          %vm698 = vweird.f32 %v568
          %vm699 = vweird.f32 %v692
          %vm700 = vmor %vm698, %vm699
          %v701 = vsel %vm700, %v692, %v697
          %v702 = vrsqrt.pop %v569
          %v703 = vmul.f32 %v702, %v569
          %v704 = vmul.f32 %v703, %v702
          %v705 = vmul.f32 0.5, %v704
          %v706 = vsub.f32 1.5, %v705
          %v707 = vmul.f32 %v702, %v706
          %vm708 = vweird.f32 %v569
          %vm709 = vweird.f32 %v702
          %vm710 = vmor %vm708, %vm709
          %v711 = vsel %vm710, %v702, %v707
          %v712 = vrsqrt.pop %v570
          %v713 = vmul.f32 %v712, %v570
          %v714 = vmul.f32 %v713, %v712
          %v715 = vmul.f32 0.5, %v714
          %v716 = vsub.f32 1.5, %v715
          %v717 = vmul.f32 %v712, %v716
          %vm718 = vweird.f32 %v570
          %vm719 = vweird.f32 %v712
          %vm720 = vmor %vm718, %vm719
          %v721 = vsel %vm720, %v712, %v717
          %v722 = vrsqrt.pop %v571
          %v723 = vmul.f32 %v722, %v571
          %v724 = vmul.f32 %v723, %v722
          %v725 = vmul.f32 0.5, %v724
          %v726 = vsub.f32 1.5, %v725
          %v727 = vmul.f32 %v722, %v726
          %vm728 = vweird.f32 %v571
          %vm729 = vweird.f32 %v722
          %vm730 = vmor %vm728, %vm729
          %v731 = vsel %vm730, %v722, %v727
          %v732 = vmul.f32 %v476, %v581
          %v733 = vmul.f32 %v477, %v591
          %v734 = vmul.f32 %v478, %v601
          %v735 = vmul.f32 %v479, %v611
          %v736 = vmul.f32 %v480, %v621
          %v737 = vmul.f32 %v481, %v631
          %v738 = vmul.f32 %v482, %v641
          %v739 = vmul.f32 %v483, %v651
          %v740 = vmul.f32 %v484, %v661
          %v741 = vmul.f32 %v485, %v671
          %v742 = vmul.f32 %v486, %v681
          %v743 = vmul.f32 %v487, %v691
          %v744 = vmul.f32 %v488, %v701
          %v745 = vmul.f32 %v489, %v711
          %v746 = vmul.f32 %v490, %v721
          %v747 = vmul.f32 %v491, %v731
          %v748 = vld [vmem:[#allocation6] sm:$0x1]
          %v750 = vperm.slane %v748, 0
          %v752 = vmul.f32 %v732, %v750
          %v753 = vmul.f32 %v733, %v750
          %v754 = vmul.f32 %v734, %v750
          %v755 = vmul.f32 %v735, %v750
          %v756 = vmul.f32 %v736, %v750
          %v757 = vmul.f32 %v737, %v750
          %v758 = vmul.f32 %v738, %v750
          %v759 = vmul.f32 %v739, %v750
          %v760 = vmul.f32 %v740, %v750
          %v761 = vmul.f32 %v741, %v750
          %v762 = vmul.f32 %v742, %v750
          %v763 = vmul.f32 %v743, %v750
          %v764 = vmul.f32 %v744, %v750
          %v765 = vmul.f32 %v745, %v750
          %v766 = vmul.f32 %v746, %v750
          %v767 = vmul.f32 %v747, %v750
          %v768 = vld [vmem:[%s2] sm:$0x1]
          %v770 = vperm.slane %v768, 0
          %v772 = vadd.f32 %v752, %v770
          %v773 = vadd.f32 %v753, %v770
          %v774 = vadd.f32 %v754, %v770
          %v775 = vadd.f32 %v755, %v770
          %v776 = vadd.f32 %v756, %v770
          %v777 = vadd.f32 %v757, %v770
          %v778 = vadd.f32 %v758, %v770
          %v779 = vadd.f32 %v759, %v770
          %v780 = vadd.f32 %v760, %v770
          %v781 = vadd.f32 %v761, %v770
          %v782 = vadd.f32 %v762, %v770
          %v783 = vadd.f32 %v763, %v770
          %v784 = vadd.f32 %v764, %v770
          %v785 = vadd.f32 %v765, %v770
          %v786 = vadd.f32 %v766, %v770
          %v787 = vadd.f32 %v767, %v770
          %v788 = vpack.c.bf16 %v772, %v772
          %v789 = vpack.c.bf16 %v773, %v773
          %v790 = vpack.c.bf16 %v774, %v774
          %v791 = vpack.c.bf16 %v775, %v775
          %v792 = vpack.c.bf16 %v776, %v776
          %v793 = vpack.c.bf16 %v777, %v777
          %v794 = vpack.c.bf16 %v778, %v778
          %v795 = vpack.c.bf16 %v779, %v779
          %v796 = vpack.c.bf16 %v780, %v780
          %v797 = vpack.c.bf16 %v781, %v781
          %v798 = vpack.c.bf16 %v782, %v782
          %v799 = vpack.c.bf16 %v783, %v783
          %v800 = vpack.c.bf16 %v784, %v784
          %v801 = vpack.c.bf16 %v785, %v785
          %v802 = vpack.c.bf16 %v786, %v786
          %v803 = vpack.c.bf16 %v787, %v787
          %804 = vst [vmem:[#allocation2] sm:$0xf] %v788
          %805 = vst [vmem:[#allocation2 + $0x4] sm:$0xf] %v789
          %806 = vst [vmem:[#allocation2 + $0x8] sm:$0xf] %v790
          %807 = vst [vmem:[#allocation2 + $0xc] sm:$0xf] %v791
          %808 = vst [vmem:[#allocation2 + $0x10] sm:$0xf] %v792
          %809 = vst [vmem:[#allocation2 + $0x14] sm:$0xf] %v793
          %810 = vst [vmem:[#allocation2 + $0x18] sm:$0xf] %v794
          %811 = vst [vmem:[#allocation2 + $0x1c] sm:$0xf] %v795
          %812 = vst [vmem:[#allocation2 + $0x20] sm:$0xf] %v796
          %813 = vst [vmem:[#allocation2 + $0x24] sm:$0xf] %v797
          %814 = vst [vmem:[#allocation2 + $0x28] sm:$0xf] %v798
          %815 = vst [vmem:[#allocation2 + $0x2c] sm:$0xf] %v799
          %816 = vst [vmem:[#allocation2 + $0x30] sm:$0xf] %v800
          %817 = vst [vmem:[#allocation2 + $0x34] sm:$0xf] %v801
          %818 = vst [vmem:[#allocation2 + $0x38] sm:$0xf] %v802
          %819 = vst [vmem:[#allocation2 + $0x3c] sm:$0xf] %v803
          %v820 = vld [vmem:[%s6] sm:$0x1]
          %v822 = vperm.slane %v820, 0
          %v824 = vadd.f32 %v405, %v822
          %v825 = vadd.f32 %v406, %v822
          %v826 = vadd.f32 %v407, %v822
          %v827 = vadd.f32 %v408, %v822
          %v828 = vadd.f32 %v409, %v822
          %v829 = vadd.f32 %v410, %v822
          %v830 = vadd.f32 %v411, %v822
          %v831 = vadd.f32 %v412, %v822
          %v832 = vadd.f32 %v413, %v822
          %v833 = vadd.f32 %v414, %v822
          %v834 = vadd.f32 %v415, %v822
          %v835 = vadd.f32 %v416, %v822
          %v836 = vadd.f32 %v417, %v822
          %v837 = vadd.f32 %v418, %v822
          %v838 = vadd.f32 %v419, %v822
          %v839 = vadd.f32 %v420, %v822
          %840 = vst [vmem:[%s395] sm:$0xff] %v824
          %841 = vst [vmem:[%s395 + $0x8] sm:$0xff] %v825
          %842 = vst [vmem:[%s395 + $0x10] sm:$0xff] %v826
          %843 = vst [vmem:[%s395 + $0x18] sm:$0xff] %v827
          %844 = vst [vmem:[%s395 + $0x20] sm:$0xff] %v828
          %845 = vst [vmem:[%s395 + $0x28] sm:$0xff] %v829
          %846 = vst [vmem:[%s395 + $0x30] sm:$0xff] %v830
          %847 = vst [vmem:[%s395 + $0x38] sm:$0xff] %v831
          %848 = vst [vmem:[%s395 + $0x40] sm:$0xff] %v832
          %849 = vst [vmem:[%s395 + $0x48] sm:$0xff] %v833
          %850 = vst [vmem:[%s395 + $0x50] sm:$0xff] %v834
          %851 = vst [vmem:[%s395 + $0x58] sm:$0xff] %v835
          %852 = vst [vmem:[%s395 + $0x60] sm:$0xff] %v836
          %853 = vst [vmem:[%s395 + $0x68] sm:$0xff] %v837
          %854 = vst [vmem:[%s395 + $0x70] sm:$0xff] %v838
          %855 = vst [vmem:[%s395 + $0x78] sm:$0xff] %v839
        $region72: #{tpu_custom_call.1} parent=47 // pred_fallthru
          _
        %v856 = vld [vmem:[#allocation2] sm:$0xf]
        %v857 = vld [vmem:[#allocation2 + $0x4] sm:$0xf]
        %v858 = vld [vmem:[#allocation2 + $0x8] sm:$0xf]
        %v859 = vld [vmem:[#allocation2 + $0xc] sm:$0xf]
        %v860 = vld [vmem:[#allocation2 + $0x10] sm:$0xf]
        %v861 = vld [vmem:[#allocation2 + $0x14] sm:$0xf]
        %v862 = vld [vmem:[#allocation2 + $0x18] sm:$0xf]
        %v863 = vld [vmem:[#allocation2 + $0x1c] sm:$0xf]
        %v864 = vld [vmem:[#allocation2 + $0x20] sm:$0xf]
        %v865 = vld [vmem:[#allocation2 + $0x24] sm:$0xf]
        %v866 = vld [vmem:[#allocation2 + $0x28] sm:$0xf]
        %v867 = vld [vmem:[#allocation2 + $0x2c] sm:$0xf]
        %v868 = vld [vmem:[#allocation2 + $0x30] sm:$0xf]
        %v869 = vld [vmem:[#allocation2 + $0x34] sm:$0xf]
        %v870 = vld [vmem:[#allocation2 + $0x38] sm:$0xf]
        %v871 = vld [vmem:[#allocation2 + $0x3c] sm:$0xf]
        %v872 = vld [vmem:[#allocation8] sm:$0xff]
        %v873 = vld [vmem:[#allocation8 + $0x8] sm:$0xff]
        %v874 = vld [vmem:[#allocation8 + $0x10] sm:$0xff]
        %v875 = vld [vmem:[#allocation8 + $0x18] sm:$0xff]
        %v876 = vld [vmem:[#allocation8 + $0x20] sm:$0xff]
        %v877 = vld [vmem:[#allocation8 + $0x28] sm:$0xff]
        %v878 = vld [vmem:[#allocation8 + $0x30] sm:$0xff]
        %v879 = vld [vmem:[#allocation8 + $0x38] sm:$0xff]
        %v880 = vld [vmem:[#allocation8 + $0x40] sm:$0xff]
        %v881 = vld [vmem:[#allocation8 + $0x48] sm:$0xff]
        %v882 = vld [vmem:[#allocation8 + $0x50] sm:$0xff]
        %v883 = vld [vmem:[#allocation8 + $0x58] sm:$0xff]
        %v884 = vld [vmem:[#allocation8 + $0x60] sm:$0xff]
        %v885 = vld [vmem:[#allocation8 + $0x68] sm:$0xff]
        %v886 = vld [vmem:[#allocation8 + $0x70] sm:$0xff]
        %v887 = vld [vmem:[#allocation8 + $0x78] sm:$0xff]
        %v888 = vld [vmem:[#allocation8 + $0x80] sm:$0xff]
        %v889 = vld [vmem:[#allocation8 + $0x88] sm:$0xff]
        %v890 = vld [vmem:[#allocation8 + $0x90] sm:$0xff]
        %v891 = vld [vmem:[#allocation8 + $0x98] sm:$0xff]
        %v892 = vld [vmem:[#allocation8 + $0xa0] sm:$0xff]
        %v893 = vld [vmem:[#allocation8 + $0xa8] sm:$0xff]
        %v894 = vld [vmem:[#allocation8 + $0xb0] sm:$0xff]
        %v895 = vld [vmem:[#allocation8 + $0xb8] sm:$0xff]
        %v896 = vld [vmem:[#allocation8 + $0xc0] sm:$0xff]
        %v897 = vld [vmem:[#allocation8 + $0xc8] sm:$0xff]
        %v898 = vld [vmem:[#allocation8 + $0xd0] sm:$0xff]
        %v899 = vld [vmem:[#allocation8 + $0xd8] sm:$0xff]
        %v900 = vld [vmem:[#allocation8 + $0xe0] sm:$0xff]
        %v901 = vld [vmem:[#allocation8 + $0xe8] sm:$0xff]
        %v902 = vld [vmem:[#allocation8 + $0xf0] sm:$0xff]
        %v903 = vld [vmem:[#allocation8 + $0xf8] sm:$0xff]
        %v904 = vld [vmem:[#allocation9] sm:$0xf]
        %v906 = vperm.slane %v904, 0
        %v907 = vperm.slane %v904, 1
        %v908 = vperm.slane %v904, 2
        %v909 = vperm.slane %v904, 3
        %v930 = vunpack.c.l.b16 %v856
        %v931 = vunpack.c.l.b16 %v857
        %v932 = vunpack.c.l.b16 %v858
        %v933 = vunpack.c.l.b16 %v859
        %v934 = vunpack.c.l.b16 %v860
        %v935 = vunpack.c.l.b16 %v861
        %v936 = vunpack.c.l.b16 %v862
        %v937 = vunpack.c.l.b16 %v863
        %v938 = vunpack.c.l.b16 %v864
        %v939 = vunpack.c.l.b16 %v865
        %v940 = vunpack.c.l.b16 %v866
        %v941 = vunpack.c.l.b16 %v867
        %v942 = vunpack.c.l.b16 %v868
        %v943 = vunpack.c.l.b16 %v869
        %v944 = vunpack.c.l.b16 %v870
        %v945 = vunpack.c.l.b16 %v871
        %v946 = vpack.c.b16 %v931, %v930
        %v947 = vpack.c.b16 %v933, %v932
        %v948 = vpack.c.b16 %v935, %v934
        %v949 = vpack.c.b16 %v937, %v936
        %v950 = vpack.c.b16 %v939, %v938
        %v951 = vpack.c.b16 %v941, %v940
        %v952 = vpack.c.b16 %v943, %v942
        %v953 = vpack.c.b16 %v945, %v944
        %v994 = vunpack.c.l.b16 %v872
        %v995 = vunpack.c.h.b16 %v872
        %v996 = vunpack.c.l.b16 %v873
        %v997 = vunpack.c.h.b16 %v873
        %v998 = vunpack.c.l.b16 %v874
        %v999 = vunpack.c.h.b16 %v874
        %v1000 = vunpack.c.l.b16 %v875
        %v1001 = vunpack.c.h.b16 %v875
        %v1002 = vunpack.c.l.b16 %v876
        %v1003 = vunpack.c.h.b16 %v876
        %v1004 = vunpack.c.l.b16 %v877
        %v1005 = vunpack.c.h.b16 %v877
        %v1006 = vunpack.c.l.b16 %v878
        %v1007 = vunpack.c.h.b16 %v878
        %v1008 = vunpack.c.l.b16 %v879
        %v1009 = vunpack.c.h.b16 %v879
        %v1010 = vunpack.c.l.b16 %v880
        %v1011 = vunpack.c.h.b16 %v880
        %v1012 = vunpack.c.l.b16 %v881
        %v1013 = vunpack.c.h.b16 %v881
        %v1014 = vunpack.c.l.b16 %v882
        %v1015 = vunpack.c.h.b16 %v882
        %v1016 = vunpack.c.l.b16 %v883
        %v1017 = vunpack.c.h.b16 %v883
        %v1018 = vunpack.c.l.b16 %v884
        %v1019 = vunpack.c.h.b16 %v884
        %v1020 = vunpack.c.l.b16 %v885
        %v1021 = vunpack.c.h.b16 %v885
        %v1022 = vunpack.c.l.b16 %v886
        %v1023 = vunpack.c.h.b16 %v886
        %v1024 = vunpack.c.l.b16 %v887
        %v1025 = vunpack.c.h.b16 %v887
        %v1026 = vunpack.c.l.b16 %v888
        %v1027 = vunpack.c.h.b16 %v888
        %v1028 = vunpack.c.l.b16 %v889
        %v1029 = vunpack.c.h.b16 %v889
        %v1030 = vunpack.c.l.b16 %v890
        %v1031 = vunpack.c.h.b16 %v890
        %v1032 = vunpack.c.l.b16 %v891
        %v1033 = vunpack.c.h.b16 %v891
        %v1034 = vunpack.c.l.b16 %v892
        %v1035 = vunpack.c.h.b16 %v892
        %v1036 = vunpack.c.l.b16 %v893
        %v1037 = vunpack.c.h.b16 %v893
        %v1038 = vunpack.c.l.b16 %v894
        %v1039 = vunpack.c.h.b16 %v894
        %v1040 = vunpack.c.l.b16 %v895
        %v1041 = vunpack.c.h.b16 %v895
        %v1042 = vunpack.c.l.b16 %v896
        %v1043 = vunpack.c.h.b16 %v896
        %v1044 = vunpack.c.l.b16 %v897
        %v1045 = vunpack.c.h.b16 %v897
        %v1046 = vunpack.c.l.b16 %v898
        %v1047 = vunpack.c.h.b16 %v898
        %v1048 = vunpack.c.l.b16 %v899
        %v1049 = vunpack.c.h.b16 %v899
        %v1050 = vunpack.c.l.b16 %v900
        %v1051 = vunpack.c.h.b16 %v900
        %v1052 = vunpack.c.l.b16 %v901
        %v1053 = vunpack.c.h.b16 %v901
        %v1054 = vunpack.c.l.b16 %v902
        %v1055 = vunpack.c.h.b16 %v902
        %v1056 = vunpack.c.l.b16 %v903
        %v1057 = vunpack.c.h.b16 %v903
        %v1058 = vpack.c.b16 %v998, %v994
        %v1059 = vpack.c.b16 %v999, %v995
        %v1060 = vpack.c.b16 %v1000, %v996
        %v1061 = vpack.c.b16 %v1001, %v997
        %v1062 = vpack.c.b16 %v1006, %v1002
        %v1063 = vpack.c.b16 %v1007, %v1003
        %v1064 = vpack.c.b16 %v1008, %v1004
        %v1065 = vpack.c.b16 %v1009, %v1005
        %v1066 = vpack.c.b16 %v1014, %v1010
        %v1067 = vpack.c.b16 %v1015, %v1011
        %v1068 = vpack.c.b16 %v1016, %v1012
        %v1069 = vpack.c.b16 %v1017, %v1013
        %v1070 = vpack.c.b16 %v1022, %v1018
        %v1071 = vpack.c.b16 %v1023, %v1019
        %v1072 = vpack.c.b16 %v1024, %v1020
        %v1073 = vpack.c.b16 %v1025, %v1021
        %v1074 = vpack.c.b16 %v1030, %v1026
        %v1075 = vpack.c.b16 %v1031, %v1027
        %v1076 = vpack.c.b16 %v1032, %v1028
        %v1077 = vpack.c.b16 %v1033, %v1029
        %v1078 = vpack.c.b16 %v1038, %v1034
        %v1079 = vpack.c.b16 %v1039, %v1035
        %v1080 = vpack.c.b16 %v1040, %v1036
        %v1081 = vpack.c.b16 %v1041, %v1037
        %v1082 = vpack.c.b16 %v1046, %v1042
        %v1083 = vpack.c.b16 %v1047, %v1043
        %v1084 = vpack.c.b16 %v1048, %v1044
        %v1085 = vpack.c.b16 %v1049, %v1045
        %v1086 = vpack.c.b16 %v1054, %v1050
        %v1087 = vpack.c.b16 %v1055, %v1051
        %v1088 = vpack.c.b16 %v1056, %v1052
        %v1089 = vpack.c.b16 %v1057, %v1053
        %1122 = vmatpush.bf16.msra.mxu0 %v1086
        %1123 = vmatpush.bf16.msra.mxu0 %v1082
        %1124 = vmatpush.bf16.msra.mxu0 %v1078
        %1125 = vmatpush.bf16.msra.mxu0 %v1074
        %1126 = vmatpush.bf16.msra.mxu0 %v1070
        %1127 = vmatpush.bf16.msra.mxu0 %v1066
        %1128 = vmatpush.bf16.msra.mxu0 %v1062
        %1129 = vmatpush.bf16.msra.mxu0 %v1058
        %1130 = vmatmul.bf16.gmra.mxu0 %v946
        %v1131 = vpop.f32.mrf.mxu0
        %v1132 = vadd.f32 %v906, %v1131
        %v1133 = vpop.f32.mrf.mxu0
        %v1134 = vadd.f32 %v906, %v1133
        %1135 = vmatmul.bf16.gmra.mxu0 %v947
        %v1136 = vpop.f32.mrf.mxu0
        %v1137 = vadd.f32 %v906, %v1136
        %v1138 = vpop.f32.mrf.mxu0
        %v1139 = vadd.f32 %v906, %v1138
        %1140 = vmatmul.bf16.gmra.mxu0 %v948
        %v1141 = vpop.f32.mrf.mxu0
        %v1142 = vadd.f32 %v906, %v1141
        %v1143 = vpop.f32.mrf.mxu0
        %v1144 = vadd.f32 %v906, %v1143
        %1145 = vmatmul.bf16.gmra.mxu0 %v949
        %v1146 = vpop.f32.mrf.mxu0
        %v1147 = vadd.f32 %v906, %v1146
        %v1148 = vpop.f32.mrf.mxu0
        %v1149 = vadd.f32 %v906, %v1148
        %1150 = vmatmul.bf16.gmra.mxu0 %v950
        %v1151 = vpop.f32.mrf.mxu0
        %v1152 = vadd.f32 %v906, %v1151
        %v1153 = vpop.f32.mrf.mxu0
        %v1154 = vadd.f32 %v906, %v1153
        %1155 = vmatmul.bf16.gmra.mxu0 %v951
        %v1156 = vpop.f32.mrf.mxu0
        %v1157 = vadd.f32 %v906, %v1156
        %v1158 = vpop.f32.mrf.mxu0
        %v1159 = vadd.f32 %v906, %v1158
        %1160 = vmatmul.bf16.gmra.mxu0 %v952
        %v1161 = vpop.f32.mrf.mxu0
        %v1162 = vadd.f32 %v906, %v1161
        %v1163 = vpop.f32.mrf.mxu0
        %v1164 = vadd.f32 %v906, %v1163
        %1165 = vmatmul.bf16.gmra.mxu0 %v953
        %v1166 = vpop.f32.mrf.mxu0
        %v1167 = vadd.f32 %v906, %v1166
        %v1168 = vpop.f32.mrf.mxu0
        %v1169 = vadd.f32 %v906, %v1168
        %1170 = vdwg.mxu0
        %1171 = vmatpush.bf16.msra.mxu0 %v1087
        %1172 = vmatpush.bf16.msra.mxu0 %v1083
        %1173 = vmatpush.bf16.msra.mxu0 %v1079
        %1174 = vmatpush.bf16.msra.mxu0 %v1075
        %1175 = vmatpush.bf16.msra.mxu0 %v1071
        %1176 = vmatpush.bf16.msra.mxu0 %v1067
        %1177 = vmatpush.bf16.msra.mxu0 %v1063
        %1178 = vmatpush.bf16.msra.mxu0 %v1059
        %1179 = vmatmul.bf16.gmra.mxu0 %v946
        %v1180 = vpop.f32.mrf.mxu0
        %v1181 = vadd.f32 %v907, %v1180
        %v1182 = vpop.f32.mrf.mxu0
        %v1183 = vadd.f32 %v907, %v1182
        %1184 = vmatmul.bf16.gmra.mxu0 %v947
        %v1185 = vpop.f32.mrf.mxu0
        %v1186 = vadd.f32 %v907, %v1185
        %v1187 = vpop.f32.mrf.mxu0
        %v1188 = vadd.f32 %v907, %v1187
        %1189 = vmatmul.bf16.gmra.mxu0 %v948
        %v1190 = vpop.f32.mrf.mxu0
        %v1191 = vadd.f32 %v907, %v1190
        %v1192 = vpop.f32.mrf.mxu0
        %v1193 = vadd.f32 %v907, %v1192
        %1194 = vmatmul.bf16.gmra.mxu0 %v949
        %v1195 = vpop.f32.mrf.mxu0
        %v1196 = vadd.f32 %v907, %v1195
        %v1197 = vpop.f32.mrf.mxu0
        %v1198 = vadd.f32 %v907, %v1197
        %1199 = vmatmul.bf16.gmra.mxu0 %v950
        %v1200 = vpop.f32.mrf.mxu0
        %v1201 = vadd.f32 %v907, %v1200
        %v1202 = vpop.f32.mrf.mxu0
        %v1203 = vadd.f32 %v907, %v1202
        %1204 = vmatmul.bf16.gmra.mxu0 %v951
        %v1205 = vpop.f32.mrf.mxu0
        %v1206 = vadd.f32 %v907, %v1205
        %v1207 = vpop.f32.mrf.mxu0
        %v1208 = vadd.f32 %v907, %v1207
        %1209 = vmatmul.bf16.gmra.mxu0 %v952
        %v1210 = vpop.f32.mrf.mxu0
        %v1211 = vadd.f32 %v907, %v1210
        %v1212 = vpop.f32.mrf.mxu0
        %v1213 = vadd.f32 %v907, %v1212
        %1214 = vmatmul.bf16.gmra.mxu0 %v953
        %v1215 = vpop.f32.mrf.mxu0
        %v1216 = vadd.f32 %v907, %v1215
        %v1217 = vpop.f32.mrf.mxu0
        %v1218 = vadd.f32 %v907, %v1217
        %1219 = vdwg.mxu0
        %1220 = vmatpush.bf16.msra.mxu0 %v1088
        %1221 = vmatpush.bf16.msra.mxu0 %v1084
        %1222 = vmatpush.bf16.msra.mxu0 %v1080
        %1223 = vmatpush.bf16.msra.mxu0 %v1076
        %1224 = vmatpush.bf16.msra.mxu0 %v1072
        %1225 = vmatpush.bf16.msra.mxu0 %v1068
        %1226 = vmatpush.bf16.msra.mxu0 %v1064
        %1227 = vmatpush.bf16.msra.mxu0 %v1060
        %1228 = vmatmul.bf16.gmra.mxu0 %v946
        %v1229 = vpop.f32.mrf.mxu0
        %v1230 = vadd.f32 %v908, %v1229
        %v1231 = vpop.f32.mrf.mxu0
        %v1232 = vadd.f32 %v908, %v1231
        %1233 = vmatmul.bf16.gmra.mxu0 %v947
        %v1234 = vpop.f32.mrf.mxu0
        %v1235 = vadd.f32 %v908, %v1234
        %v1236 = vpop.f32.mrf.mxu0
        %v1237 = vadd.f32 %v908, %v1236
        %1238 = vmatmul.bf16.gmra.mxu0 %v948
        %v1239 = vpop.f32.mrf.mxu0
        %v1240 = vadd.f32 %v908, %v1239
        %v1241 = vpop.f32.mrf.mxu0
        %v1242 = vadd.f32 %v908, %v1241
        %1243 = vmatmul.bf16.gmra.mxu0 %v949
        %v1244 = vpop.f32.mrf.mxu0
        %v1245 = vadd.f32 %v908, %v1244
        %v1246 = vpop.f32.mrf.mxu0
        %v1247 = vadd.f32 %v908, %v1246
        %1248 = vmatmul.bf16.gmra.mxu0 %v950
        %v1249 = vpop.f32.mrf.mxu0
        %v1250 = vadd.f32 %v908, %v1249
        %v1251 = vpop.f32.mrf.mxu0
        %v1252 = vadd.f32 %v908, %v1251
        %1253 = vmatmul.bf16.gmra.mxu0 %v951
        %v1254 = vpop.f32.mrf.mxu0
        %v1255 = vadd.f32 %v908, %v1254
        %v1256 = vpop.f32.mrf.mxu0
        %v1257 = vadd.f32 %v908, %v1256
        %1258 = vmatmul.bf16.gmra.mxu0 %v952
        %v1259 = vpop.f32.mrf.mxu0
        %v1260 = vadd.f32 %v908, %v1259
        %v1261 = vpop.f32.mrf.mxu0
        %v1262 = vadd.f32 %v908, %v1261
        %1263 = vmatmul.bf16.gmra.mxu0 %v953
        %v1264 = vpop.f32.mrf.mxu0
        %v1265 = vadd.f32 %v908, %v1264
        %v1266 = vpop.f32.mrf.mxu0
        %v1267 = vadd.f32 %v908, %v1266
        %1268 = vdwg.mxu0
        %1269 = vmatpush.bf16.msra.mxu0 %v1089
        %1270 = vmatpush.bf16.msra.mxu0 %v1085
        %1271 = vmatpush.bf16.msra.mxu0 %v1081
        %1272 = vmatpush.bf16.msra.mxu0 %v1077
        %1273 = vmatpush.bf16.msra.mxu0 %v1073
        %1274 = vmatpush.bf16.msra.mxu0 %v1069
        %1275 = vmatpush.bf16.msra.mxu0 %v1065
        %1276 = vmatpush.bf16.msra.mxu0 %v1061
        %1277 = vmatmul.bf16.gmra.mxu0 %v946
        %v1278 = vpop.f32.mrf.mxu0
        %v1279 = vadd.f32 %v909, %v1278
        %v1280 = vpop.f32.mrf.mxu0
        %v1281 = vadd.f32 %v909, %v1280
        %1282 = vmatmul.bf16.gmra.mxu0 %v947
        %v1283 = vpop.f32.mrf.mxu0
        %v1284 = vadd.f32 %v909, %v1283
        %v1285 = vpop.f32.mrf.mxu0
        %v1286 = vadd.f32 %v909, %v1285
        %1287 = vmatmul.bf16.gmra.mxu0 %v948
        %v1288 = vpop.f32.mrf.mxu0
        %v1289 = vadd.f32 %v909, %v1288
        %v1290 = vpop.f32.mrf.mxu0
        %v1291 = vadd.f32 %v909, %v1290
        %1292 = vmatmul.bf16.gmra.mxu0 %v949
        %v1293 = vpop.f32.mrf.mxu0
        %v1294 = vadd.f32 %v909, %v1293
        %v1295 = vpop.f32.mrf.mxu0
        %v1296 = vadd.f32 %v909, %v1295
        %1297 = vmatmul.bf16.gmra.mxu0 %v950
        %v1298 = vpop.f32.mrf.mxu0
        %v1299 = vadd.f32 %v909, %v1298
        %v1300 = vpop.f32.mrf.mxu0
        %v1301 = vadd.f32 %v909, %v1300
        %1302 = vmatmul.bf16.gmra.mxu0 %v951
        %v1303 = vpop.f32.mrf.mxu0
        %v1304 = vadd.f32 %v909, %v1303
        %v1305 = vpop.f32.mrf.mxu0
        %v1306 = vadd.f32 %v909, %v1305
        %1307 = vmatmul.bf16.gmra.mxu0 %v952
        %v1308 = vpop.f32.mrf.mxu0
        %v1309 = vadd.f32 %v909, %v1308
        %v1310 = vpop.f32.mrf.mxu0
        %v1311 = vadd.f32 %v909, %v1310
        %1312 = vmatmul.bf16.gmra.mxu0 %v953
        %v1313 = vpop.f32.mrf.mxu0
        %v1314 = vadd.f32 %v909, %v1313
        %v1315 = vpop.f32.mrf.mxu0
        %v1316 = vadd.f32 %v909, %v1315
        %1317 = vdwg.mxu0
        %v1318 = vmul.f32 %v1132, 0.5
        %v1319 = vmul.f32 %v1181, 0.5
        %v1320 = vmul.f32 %v1230, 0.5
        %v1321 = vmul.f32 %v1279, 0.5
        %v1322 = vmul.f32 %v1134, 0.5
        %v1323 = vmul.f32 %v1183, 0.5
        %v1324 = vmul.f32 %v1232, 0.5
        %v1325 = vmul.f32 %v1281, 0.5
        %v1326 = vmul.f32 %v1137, 0.5
        %v1327 = vmul.f32 %v1186, 0.5
        %v1328 = vmul.f32 %v1235, 0.5
        %v1329 = vmul.f32 %v1284, 0.5
        %v1330 = vmul.f32 %v1139, 0.5
        %v1331 = vmul.f32 %v1188, 0.5
        %v1332 = vmul.f32 %v1237, 0.5
        %v1333 = vmul.f32 %v1286, 0.5
        %v1334 = vmul.f32 %v1142, 0.5
        %v1335 = vmul.f32 %v1191, 0.5
        %v1336 = vmul.f32 %v1240, 0.5
        %v1337 = vmul.f32 %v1289, 0.5
        %v1338 = vmul.f32 %v1144, 0.5
        %v1339 = vmul.f32 %v1193, 0.5
        %v1340 = vmul.f32 %v1242, 0.5
        %v1341 = vmul.f32 %v1291, 0.5
        %v1342 = vmul.f32 %v1147, 0.5
        %v1343 = vmul.f32 %v1196, 0.5
        %v1344 = vmul.f32 %v1245, 0.5
        %v1345 = vmul.f32 %v1294, 0.5
        %v1346 = vmul.f32 %v1149, 0.5
        %v1347 = vmul.f32 %v1198, 0.5
        %v1348 = vmul.f32 %v1247, 0.5
        %v1349 = vmul.f32 %v1296, 0.5
        %v1350 = vmul.f32 %v1152, 0.5
        %v1351 = vmul.f32 %v1201, 0.5
        %v1352 = vmul.f32 %v1250, 0.5
        %v1353 = vmul.f32 %v1299, 0.5
        %v1354 = vmul.f32 %v1154, 0.5
        %v1355 = vmul.f32 %v1203, 0.5
        %v1356 = vmul.f32 %v1252, 0.5
        %v1357 = vmul.f32 %v1301, 0.5
        %v1358 = vmul.f32 %v1157, 0.5
        %v1359 = vmul.f32 %v1206, 0.5
        %v1360 = vmul.f32 %v1255, 0.5
        %v1361 = vmul.f32 %v1304, 0.5
        %v1362 = vmul.f32 %v1159, 0.5
        %v1363 = vmul.f32 %v1208, 0.5
        %v1364 = vmul.f32 %v1257, 0.5
        %v1365 = vmul.f32 %v1306, 0.5
        %v1366 = vmul.f32 %v1162, 0.5
        %v1367 = vmul.f32 %v1211, 0.5
        %v1368 = vmul.f32 %v1260, 0.5
        %v1369 = vmul.f32 %v1309, 0.5
        %v1370 = vmul.f32 %v1164, 0.5
        %v1371 = vmul.f32 %v1213, 0.5
        %v1372 = vmul.f32 %v1262, 0.5
        %v1373 = vmul.f32 %v1311, 0.5
        %v1374 = vmul.f32 %v1167, 0.5
        %v1375 = vmul.f32 %v1216, 0.5
        %v1376 = vmul.f32 %v1265, 0.5
        %v1377 = vmul.f32 %v1314, 0.5
        %v1378 = vmul.f32 %v1169, 0.5
        %v1379 = vmul.f32 %v1218, 0.5
        %v1380 = vmul.f32 %v1267, 0.5
        %v1381 = vmul.f32 %v1316, 0.5
        %v1382 = vmul.f32 %v1132, %v1132
        %v1383 = vmul.f32 %v1181, %v1181
        %v1384 = vmul.f32 %v1230, %v1230
        %v1385 = vmul.f32 %v1279, %v1279
        %v1386 = vmul.f32 %v1134, %v1134
        %v1387 = vmul.f32 %v1183, %v1183
        %v1388 = vmul.f32 %v1232, %v1232
        %v1389 = vmul.f32 %v1281, %v1281
        %v1390 = vmul.f32 %v1137, %v1137
        %v1391 = vmul.f32 %v1186, %v1186
        %v1392 = vmul.f32 %v1235, %v1235
        %v1393 = vmul.f32 %v1284, %v1284
        %v1394 = vmul.f32 %v1139, %v1139
        %v1395 = vmul.f32 %v1188, %v1188
        %v1396 = vmul.f32 %v1237, %v1237
        %v1397 = vmul.f32 %v1286, %v1286
        %v1398 = vmul.f32 %v1142, %v1142
        %v1399 = vmul.f32 %v1191, %v1191
        %v1400 = vmul.f32 %v1240, %v1240
        %v1401 = vmul.f32 %v1289, %v1289
        %v1402 = vmul.f32 %v1144, %v1144
        %v1403 = vmul.f32 %v1193, %v1193
        %v1404 = vmul.f32 %v1242, %v1242
        %v1405 = vmul.f32 %v1291, %v1291
        %v1406 = vmul.f32 %v1147, %v1147
        %v1407 = vmul.f32 %v1196, %v1196
        %v1408 = vmul.f32 %v1245, %v1245
        %v1409 = vmul.f32 %v1294, %v1294
        %v1410 = vmul.f32 %v1149, %v1149
        %v1411 = vmul.f32 %v1198, %v1198
        %v1412 = vmul.f32 %v1247, %v1247
        %v1413 = vmul.f32 %v1296, %v1296
        %v1414 = vmul.f32 %v1152, %v1152
        %v1415 = vmul.f32 %v1201, %v1201
        %v1416 = vmul.f32 %v1250, %v1250
        %v1417 = vmul.f32 %v1299, %v1299
        %v1418 = vmul.f32 %v1154, %v1154
        %v1419 = vmul.f32 %v1203, %v1203
        %v1420 = vmul.f32 %v1252, %v1252
        %v1421 = vmul.f32 %v1301, %v1301
        %v1422 = vmul.f32 %v1157, %v1157
        %v1423 = vmul.f32 %v1206, %v1206
        %v1424 = vmul.f32 %v1255, %v1255
        %v1425 = vmul.f32 %v1304, %v1304
        %v1426 = vmul.f32 %v1159, %v1159
        %v1427 = vmul.f32 %v1208, %v1208
        %v1428 = vmul.f32 %v1257, %v1257
        %v1429 = vmul.f32 %v1306, %v1306
        %v1430 = vmul.f32 %v1162, %v1162
        %v1431 = vmul.f32 %v1211, %v1211
        %v1432 = vmul.f32 %v1260, %v1260
        %v1433 = vmul.f32 %v1309, %v1309
        %v1434 = vmul.f32 %v1164, %v1164
        %v1435 = vmul.f32 %v1213, %v1213
        %v1436 = vmul.f32 %v1262, %v1262
        %v1437 = vmul.f32 %v1311, %v1311
        %v1438 = vmul.f32 %v1167, %v1167
        %v1439 = vmul.f32 %v1216, %v1216
        %v1440 = vmul.f32 %v1265, %v1265
        %v1441 = vmul.f32 %v1314, %v1314
        %v1442 = vmul.f32 %v1169, %v1169
        %v1443 = vmul.f32 %v1218, %v1218
        %v1444 = vmul.f32 %v1267, %v1267
        %v1445 = vmul.f32 %v1316, %v1316
        %v1446 = vmul.f32 %v1382, %v1132
        %v1447 = vmul.f32 %v1383, %v1181
        %v1448 = vmul.f32 %v1384, %v1230
        %v1449 = vmul.f32 %v1385, %v1279
        %v1450 = vmul.f32 %v1386, %v1134
        %v1451 = vmul.f32 %v1387, %v1183
        %v1452 = vmul.f32 %v1388, %v1232
        %v1453 = vmul.f32 %v1389, %v1281
        %v1454 = vmul.f32 %v1390, %v1137
        %v1455 = vmul.f32 %v1391, %v1186
        %v1456 = vmul.f32 %v1392, %v1235
        %v1457 = vmul.f32 %v1393, %v1284
        %v1458 = vmul.f32 %v1394, %v1139
        %v1459 = vmul.f32 %v1395, %v1188
        %v1460 = vmul.f32 %v1396, %v1237
        %v1461 = vmul.f32 %v1397, %v1286
        %v1462 = vmul.f32 %v1398, %v1142
        %v1463 = vmul.f32 %v1399, %v1191
        %v1464 = vmul.f32 %v1400, %v1240
        %v1465 = vmul.f32 %v1401, %v1289
        %v1466 = vmul.f32 %v1402, %v1144
        %v1467 = vmul.f32 %v1403, %v1193
        %v1468 = vmul.f32 %v1404, %v1242
        %v1469 = vmul.f32 %v1405, %v1291
        %v1470 = vmul.f32 %v1406, %v1147
        %v1471 = vmul.f32 %v1407, %v1196
        %v1472 = vmul.f32 %v1408, %v1245
        %v1473 = vmul.f32 %v1409, %v1294
        %v1474 = vmul.f32 %v1410, %v1149
        %v1475 = vmul.f32 %v1411, %v1198
        %v1476 = vmul.f32 %v1412, %v1247
        %v1477 = vmul.f32 %v1413, %v1296
        %v1478 = vmul.f32 %v1414, %v1152
        %v1479 = vmul.f32 %v1415, %v1201
        %v1480 = vmul.f32 %v1416, %v1250
        %v1481 = vmul.f32 %v1417, %v1299
        %v1482 = vmul.f32 %v1418, %v1154
        %v1483 = vmul.f32 %v1419, %v1203
        %v1484 = vmul.f32 %v1420, %v1252
        %v1485 = vmul.f32 %v1421, %v1301
        %v1486 = vmul.f32 %v1422, %v1157
        %v1487 = vmul.f32 %v1423, %v1206
        %v1488 = vmul.f32 %v1424, %v1255
        %v1489 = vmul.f32 %v1425, %v1304
        %v1490 = vmul.f32 %v1426, %v1159
        %v1491 = vmul.f32 %v1427, %v1208
        %v1492 = vmul.f32 %v1428, %v1257
        %v1493 = vmul.f32 %v1429, %v1306
        %v1494 = vmul.f32 %v1430, %v1162
        %v1495 = vmul.f32 %v1431, %v1211
        %v1496 = vmul.f32 %v1432, %v1260
        %v1497 = vmul.f32 %v1433, %v1309
        %v1498 = vmul.f32 %v1434, %v1164
        %v1499 = vmul.f32 %v1435, %v1213
        %v1500 = vmul.f32 %v1436, %v1262
        %v1501 = vmul.f32 %v1437, %v1311
        %v1502 = vmul.f32 %v1438, %v1167
        %v1503 = vmul.f32 %v1439, %v1216
        %v1504 = vmul.f32 %v1440, %v1265
        %v1505 = vmul.f32 %v1441, %v1314
        %v1506 = vmul.f32 %v1442, %v1169
        %v1507 = vmul.f32 %v1443, %v1218
        %v1508 = vmul.f32 %v1444, %v1267
        %v1509 = vmul.f32 %v1445, %v1316
        %v1510 = vmul.f32 %v1446, 0.044715
        %v1511 = vmul.f32 %v1447, 0.044715
        %v1512 = vmul.f32 %v1448, 0.044715
        %v1513 = vmul.f32 %v1449, 0.044715
        %v1514 = vmul.f32 %v1450, 0.044715
        %v1515 = vmul.f32 %v1451, 0.044715
        %v1516 = vmul.f32 %v1452, 0.044715
        %v1517 = vmul.f32 %v1453, 0.044715
        %v1518 = vmul.f32 %v1454, 0.044715
        %v1519 = vmul.f32 %v1455, 0.044715
        %v1520 = vmul.f32 %v1456, 0.044715
        %v1521 = vmul.f32 %v1457, 0.044715
        %v1522 = vmul.f32 %v1458, 0.044715
        %v1523 = vmul.f32 %v1459, 0.044715
        %v1524 = vmul.f32 %v1460, 0.044715
        %v1525 = vmul.f32 %v1461, 0.044715
        %v1526 = vmul.f32 %v1462, 0.044715
        %v1527 = vmul.f32 %v1463, 0.044715
        %v1528 = vmul.f32 %v1464, 0.044715
        %v1529 = vmul.f32 %v1465, 0.044715
        %v1530 = vmul.f32 %v1466, 0.044715
        %v1531 = vmul.f32 %v1467, 0.044715
        %v1532 = vmul.f32 %v1468, 0.044715
        %v1533 = vmul.f32 %v1469, 0.044715
        %v1534 = vmul.f32 %v1470, 0.044715
        %v1535 = vmul.f32 %v1471, 0.044715
        %v1536 = vmul.f32 %v1472, 0.044715
        %v1537 = vmul.f32 %v1473, 0.044715
        %v1538 = vmul.f32 %v1474, 0.044715
        %v1539 = vmul.f32 %v1475, 0.044715
        %v1540 = vmul.f32 %v1476, 0.044715
        %v1541 = vmul.f32 %v1477, 0.044715
        %v1542 = vmul.f32 %v1478, 0.044715
        %v1543 = vmul.f32 %v1479, 0.044715
        %v1544 = vmul.f32 %v1480, 0.044715
        %v1545 = vmul.f32 %v1481, 0.044715
        %v1546 = vmul.f32 %v1482, 0.044715
        %v1547 = vmul.f32 %v1483, 0.044715
        %v1548 = vmul.f32 %v1484, 0.044715
        %v1549 = vmul.f32 %v1485, 0.044715
        %v1550 = vmul.f32 %v1486, 0.044715
        %v1551 = vmul.f32 %v1487, 0.044715
        %v1552 = vmul.f32 %v1488, 0.044715
        %v1553 = vmul.f32 %v1489, 0.044715
        %v1554 = vmul.f32 %v1490, 0.044715
        %v1555 = vmul.f32 %v1491, 0.044715
        %v1556 = vmul.f32 %v1492, 0.044715
        %v1557 = vmul.f32 %v1493, 0.044715
        %v1558 = vmul.f32 %v1494, 0.044715
        %v1559 = vmul.f32 %v1495, 0.044715
        %v1560 = vmul.f32 %v1496, 0.044715
        %v1561 = vmul.f32 %v1497, 0.044715
        %v1562 = vmul.f32 %v1498, 0.044715
        %v1563 = vmul.f32 %v1499, 0.044715
        %v1564 = vmul.f32 %v1500, 0.044715
        %v1565 = vmul.f32 %v1501, 0.044715
        %v1566 = vmul.f32 %v1502, 0.044715
        %v1567 = vmul.f32 %v1503, 0.044715
        %v1568 = vmul.f32 %v1504, 0.044715
        %v1569 = vmul.f32 %v1505, 0.044715
        %v1570 = vmul.f32 %v1506, 0.044715
        %v1571 = vmul.f32 %v1507, 0.044715
        %v1572 = vmul.f32 %v1508, 0.044715
        %v1573 = vmul.f32 %v1509, 0.044715
        %v1574 = vadd.f32 %v1132, %v1510
        %v1575 = vadd.f32 %v1181, %v1511
        %v1576 = vadd.f32 %v1230, %v1512
        %v1577 = vadd.f32 %v1279, %v1513
        %v1578 = vadd.f32 %v1134, %v1514
        %v1579 = vadd.f32 %v1183, %v1515
        %v1580 = vadd.f32 %v1232, %v1516
        %v1581 = vadd.f32 %v1281, %v1517
        %v1582 = vadd.f32 %v1137, %v1518
        %v1583 = vadd.f32 %v1186, %v1519
        %v1584 = vadd.f32 %v1235, %v1520
        %v1585 = vadd.f32 %v1284, %v1521
        %v1586 = vadd.f32 %v1139, %v1522
        %v1587 = vadd.f32 %v1188, %v1523
        %v1588 = vadd.f32 %v1237, %v1524
        %v1589 = vadd.f32 %v1286, %v1525
        %v1590 = vadd.f32 %v1142, %v1526
        %v1591 = vadd.f32 %v1191, %v1527
        %v1592 = vadd.f32 %v1240, %v1528
        %v1593 = vadd.f32 %v1289, %v1529
        %v1594 = vadd.f32 %v1144, %v1530
        %v1595 = vadd.f32 %v1193, %v1531
        %v1596 = vadd.f32 %v1242, %v1532
        %v1597 = vadd.f32 %v1291, %v1533
        %v1598 = vadd.f32 %v1147, %v1534
        %v1599 = vadd.f32 %v1196, %v1535
        %v1600 = vadd.f32 %v1245, %v1536
        %v1601 = vadd.f32 %v1294, %v1537
        %v1602 = vadd.f32 %v1149, %v1538
        %v1603 = vadd.f32 %v1198, %v1539
        %v1604 = vadd.f32 %v1247, %v1540
        %v1605 = vadd.f32 %v1296, %v1541
        %v1606 = vadd.f32 %v1152, %v1542
        %v1607 = vadd.f32 %v1201, %v1543
        %v1608 = vadd.f32 %v1250, %v1544
        %v1609 = vadd.f32 %v1299, %v1545
        %v1610 = vadd.f32 %v1154, %v1546
        %v1611 = vadd.f32 %v1203, %v1547
        %v1612 = vadd.f32 %v1252, %v1548
        %v1613 = vadd.f32 %v1301, %v1549
        %v1614 = vadd.f32 %v1157, %v1550
        %v1615 = vadd.f32 %v1206, %v1551
        %v1616 = vadd.f32 %v1255, %v1552
        %v1617 = vadd.f32 %v1304, %v1553
        %v1618 = vadd.f32 %v1159, %v1554
        %v1619 = vadd.f32 %v1208, %v1555
        %v1620 = vadd.f32 %v1257, %v1556
        %v1621 = vadd.f32 %v1306, %v1557
        %v1622 = vadd.f32 %v1162, %v1558
        %v1623 = vadd.f32 %v1211, %v1559
        %v1624 = vadd.f32 %v1260, %v1560
        %v1625 = vadd.f32 %v1309, %v1561
        %v1626 = vadd.f32 %v1164, %v1562
        %v1627 = vadd.f32 %v1213, %v1563
        %v1628 = vadd.f32 %v1262, %v1564
        %v1629 = vadd.f32 %v1311, %v1565
        %v1630 = vadd.f32 %v1167, %v1566
        %v1631 = vadd.f32 %v1216, %v1567
        %v1632 = vadd.f32 %v1265, %v1568
        %v1633 = vadd.f32 %v1314, %v1569
        %v1634 = vadd.f32 %v1169, %v1570
        %v1635 = vadd.f32 %v1218, %v1571
        %v1636 = vadd.f32 %v1267, %v1572
        %v1637 = vadd.f32 %v1316, %v1573
        %v1638 = vmul.f32 %v1574, 0.7978846
        %v1639 = vmul.f32 %v1575, 0.7978846
        %v1640 = vmul.f32 %v1576, 0.7978846
        %v1641 = vmul.f32 %v1577, 0.7978846
        %v1642 = vmul.f32 %v1578, 0.7978846
        %v1643 = vmul.f32 %v1579, 0.7978846
        %v1644 = vmul.f32 %v1580, 0.7978846
        %v1645 = vmul.f32 %v1581, 0.7978846
        %v1646 = vmul.f32 %v1582, 0.7978846
        %v1647 = vmul.f32 %v1583, 0.7978846
        %v1648 = vmul.f32 %v1584, 0.7978846
        %v1649 = vmul.f32 %v1585, 0.7978846
        %v1650 = vmul.f32 %v1586, 0.7978846
        %v1651 = vmul.f32 %v1587, 0.7978846
        %v1652 = vmul.f32 %v1588, 0.7978846
        %v1653 = vmul.f32 %v1589, 0.7978846
        %v1654 = vmul.f32 %v1590, 0.7978846
        %v1655 = vmul.f32 %v1591, 0.7978846
        %v1656 = vmul.f32 %v1592, 0.7978846
        %v1657 = vmul.f32 %v1593, 0.7978846
        %v1658 = vmul.f32 %v1594, 0.7978846
        %v1659 = vmul.f32 %v1595, 0.7978846
        %v1660 = vmul.f32 %v1596, 0.7978846
        %v1661 = vmul.f32 %v1597, 0.7978846
        %v1662 = vmul.f32 %v1598, 0.7978846
        %v1663 = vmul.f32 %v1599, 0.7978846
        %v1664 = vmul.f32 %v1600, 0.7978846
        %v1665 = vmul.f32 %v1601, 0.7978846
        %v1666 = vmul.f32 %v1602, 0.7978846
        %v1667 = vmul.f32 %v1603, 0.7978846
        %v1668 = vmul.f32 %v1604, 0.7978846
        %v1669 = vmul.f32 %v1605, 0.7978846
        %v1670 = vmul.f32 %v1606, 0.7978846
        %v1671 = vmul.f32 %v1607, 0.7978846
        %v1672 = vmul.f32 %v1608, 0.7978846
        %v1673 = vmul.f32 %v1609, 0.7978846
        %v1674 = vmul.f32 %v1610, 0.7978846
        %v1675 = vmul.f32 %v1611, 0.7978846
        %v1676 = vmul.f32 %v1612, 0.7978846
        %v1677 = vmul.f32 %v1613, 0.7978846
        %v1678 = vmul.f32 %v1614, 0.7978846
        %v1679 = vmul.f32 %v1615, 0.7978846
        %v1680 = vmul.f32 %v1616, 0.7978846
        %v1681 = vmul.f32 %v1617, 0.7978846
        %v1682 = vmul.f32 %v1618, 0.7978846
        %v1683 = vmul.f32 %v1619, 0.7978846
        %v1684 = vmul.f32 %v1620, 0.7978846
        %v1685 = vmul.f32 %v1621, 0.7978846
        %v1686 = vmul.f32 %v1622, 0.7978846
        %v1687 = vmul.f32 %v1623, 0.7978846
        %v1688 = vmul.f32 %v1624, 0.7978846
        %v1689 = vmul.f32 %v1625, 0.7978846
        %v1690 = vmul.f32 %v1626, 0.7978846
        %v1691 = vmul.f32 %v1627, 0.7978846
        %v1692 = vmul.f32 %v1628, 0.7978846
        %v1693 = vmul.f32 %v1629, 0.7978846
        %v1694 = vmul.f32 %v1630, 0.7978846
        %v1695 = vmul.f32 %v1631, 0.7978846
        %v1696 = vmul.f32 %v1632, 0.7978846
        %v1697 = vmul.f32 %v1633, 0.7978846
        %v1698 = vmul.f32 %v1634, 0.7978846
        %v1699 = vmul.f32 %v1635, 0.7978846
        %v1700 = vmul.f32 %v1636, 0.7978846
        %v1701 = vmul.f32 %v1637, 0.7978846
        %v1702 = vtanh.pop %v1638
        %v1703 = vtanh.pop %v1639
        %v1704 = vtanh.pop %v1640
        %v1705 = vtanh.pop %v1641
        %v1706 = vtanh.pop %v1642
        %v1707 = vtanh.pop %v1643
        %v1708 = vtanh.pop %v1644
        %v1709 = vtanh.pop %v1645
        %v1710 = vtanh.pop %v1646
        %v1711 = vtanh.pop %v1647
        %v1712 = vtanh.pop %v1648
        %v1713 = vtanh.pop %v1649
        %v1714 = vtanh.pop %v1650
        %v1715 = vtanh.pop %v1651
        %v1716 = vtanh.pop %v1652
        %v1717 = vtanh.pop %v1653
        %v1718 = vtanh.pop %v1654
        %v1719 = vtanh.pop %v1655
        %v1720 = vtanh.pop %v1656
        %v1721 = vtanh.pop %v1657
        %v1722 = vtanh.pop %v1658
        %v1723 = vtanh.pop %v1659
        %v1724 = vtanh.pop %v1660
        %v1725 = vtanh.pop %v1661
        %v1726 = vtanh.pop %v1662
        %v1727 = vtanh.pop %v1663
        %v1728 = vtanh.pop %v1664
        %v1729 = vtanh.pop %v1665
        %v1730 = vtanh.pop %v1666
        %v1731 = vtanh.pop %v1667
        %v1732 = vtanh.pop %v1668
        %v1733 = vtanh.pop %v1669
        %v1734 = vtanh.pop %v1670
        %v1735 = vtanh.pop %v1671
        %v1736 = vtanh.pop %v1672
        %v1737 = vtanh.pop %v1673
        %v1738 = vtanh.pop %v1674
        %v1739 = vtanh.pop %v1675
        %v1740 = vtanh.pop %v1676
        %v1741 = vtanh.pop %v1677
        %v1742 = vtanh.pop %v1678
        %v1743 = vtanh.pop %v1679
        %v1744 = vtanh.pop %v1680
        %v1745 = vtanh.pop %v1681
        %v1746 = vtanh.pop %v1682
        %v1747 = vtanh.pop %v1683
        %v1748 = vtanh.pop %v1684
        %v1749 = vtanh.pop %v1685
        %v1750 = vtanh.pop %v1686
        %v1751 = vtanh.pop %v1687
        %v1752 = vtanh.pop %v1688
        %v1753 = vtanh.pop %v1689
        %v1754 = vtanh.pop %v1690
        %v1755 = vtanh.pop %v1691
        %v1756 = vtanh.pop %v1692
        %v1757 = vtanh.pop %v1693
        %v1758 = vtanh.pop %v1694
        %v1759 = vtanh.pop %v1695
        %v1760 = vtanh.pop %v1696
        %v1761 = vtanh.pop %v1697
        %v1762 = vtanh.pop %v1698
        %v1763 = vtanh.pop %v1699
        %v1764 = vtanh.pop %v1700
        %v1765 = vtanh.pop %v1701
        %v1766 = vadd.f32 %v1702, 1.0
        %v1767 = vadd.f32 %v1703, 1.0
        %v1768 = vadd.f32 %v1704, 1.0
        %v1769 = vadd.f32 %v1705, 1.0
        %v1770 = vadd.f32 %v1706, 1.0
        %v1771 = vadd.f32 %v1707, 1.0
        %v1772 = vadd.f32 %v1708, 1.0
        %v1773 = vadd.f32 %v1709, 1.0
        %v1774 = vadd.f32 %v1710, 1.0
        %v1775 = vadd.f32 %v1711, 1.0
        %v1776 = vadd.f32 %v1712, 1.0
        %v1777 = vadd.f32 %v1713, 1.0
        %v1778 = vadd.f32 %v1714, 1.0
        %v1779 = vadd.f32 %v1715, 1.0
        %v1780 = vadd.f32 %v1716, 1.0
        %v1781 = vadd.f32 %v1717, 1.0
        %v1782 = vadd.f32 %v1718, 1.0
        %v1783 = vadd.f32 %v1719, 1.0
        %v1784 = vadd.f32 %v1720, 1.0
        %v1785 = vadd.f32 %v1721, 1.0
        %v1786 = vadd.f32 %v1722, 1.0
        %v1787 = vadd.f32 %v1723, 1.0
        %v1788 = vadd.f32 %v1724, 1.0
        %v1789 = vadd.f32 %v1725, 1.0
        %v1790 = vadd.f32 %v1726, 1.0
        %v1791 = vadd.f32 %v1727, 1.0
        %v1792 = vadd.f32 %v1728, 1.0
        %v1793 = vadd.f32 %v1729, 1.0
        %v1794 = vadd.f32 %v1730, 1.0
        %v1795 = vadd.f32 %v1731, 1.0
        %v1796 = vadd.f32 %v1732, 1.0
        %v1797 = vadd.f32 %v1733, 1.0
        %v1798 = vadd.f32 %v1734, 1.0
        %v1799 = vadd.f32 %v1735, 1.0
        %v1800 = vadd.f32 %v1736, 1.0
        %v1801 = vadd.f32 %v1737, 1.0
        %v1802 = vadd.f32 %v1738, 1.0
        %v1803 = vadd.f32 %v1739, 1.0
        %v1804 = vadd.f32 %v1740, 1.0
        %v1805 = vadd.f32 %v1741, 1.0
        %v1806 = vadd.f32 %v1742, 1.0
        %v1807 = vadd.f32 %v1743, 1.0
        %v1808 = vadd.f32 %v1744, 1.0
        %v1809 = vadd.f32 %v1745, 1.0
        %v1810 = vadd.f32 %v1746, 1.0
        %v1811 = vadd.f32 %v1747, 1.0
        %v1812 = vadd.f32 %v1748, 1.0
        %v1813 = vadd.f32 %v1749, 1.0
        %v1814 = vadd.f32 %v1750, 1.0
        %v1815 = vadd.f32 %v1751, 1.0
        %v1816 = vadd.f32 %v1752, 1.0
        %v1817 = vadd.f32 %v1753, 1.0
        %v1818 = vadd.f32 %v1754, 1.0
        %v1819 = vadd.f32 %v1755, 1.0
        %v1820 = vadd.f32 %v1756, 1.0
        %v1821 = vadd.f32 %v1757, 1.0
        %v1822 = vadd.f32 %v1758, 1.0
        %v1823 = vadd.f32 %v1759, 1.0
        %v1824 = vadd.f32 %v1760, 1.0
        %v1825 = vadd.f32 %v1761, 1.0
        %v1826 = vadd.f32 %v1762, 1.0
        %v1827 = vadd.f32 %v1763, 1.0
        %v1828 = vadd.f32 %v1764, 1.0
        %v1829 = vadd.f32 %v1765, 1.0
        %v1830 = vmul.f32 %v1318, %v1766
        %v1831 = vmul.f32 %v1319, %v1767
        %v1832 = vmul.f32 %v1320, %v1768
        %v1833 = vmul.f32 %v1321, %v1769
        %v1834 = vmul.f32 %v1322, %v1770
        %v1835 = vmul.f32 %v1323, %v1771
        %v1836 = vmul.f32 %v1324, %v1772
        %v1837 = vmul.f32 %v1325, %v1773
        %v1838 = vmul.f32 %v1326, %v1774
        %v1839 = vmul.f32 %v1327, %v1775
        %v1840 = vmul.f32 %v1328, %v1776
        %v1841 = vmul.f32 %v1329, %v1777
        %v1842 = vmul.f32 %v1330, %v1778
        %v1843 = vmul.f32 %v1331, %v1779
        %v1844 = vmul.f32 %v1332, %v1780
        %v1845 = vmul.f32 %v1333, %v1781
        %v1846 = vmul.f32 %v1334, %v1782
        %v1847 = vmul.f32 %v1335, %v1783
        %v1848 = vmul.f32 %v1336, %v1784
        %v1849 = vmul.f32 %v1337, %v1785
        %v1850 = vmul.f32 %v1338, %v1786
        %v1851 = vmul.f32 %v1339, %v1787
        %v1852 = vmul.f32 %v1340, %v1788
        %v1853 = vmul.f32 %v1341, %v1789
        %v1854 = vmul.f32 %v1342, %v1790
        %v1855 = vmul.f32 %v1343, %v1791
        %v1856 = vmul.f32 %v1344, %v1792
        %v1857 = vmul.f32 %v1345, %v1793
        %v1858 = vmul.f32 %v1346, %v1794
        %v1859 = vmul.f32 %v1347, %v1795
        %v1860 = vmul.f32 %v1348, %v1796
        %v1861 = vmul.f32 %v1349, %v1797
        %v1862 = vmul.f32 %v1350, %v1798
        %v1863 = vmul.f32 %v1351, %v1799
        %v1864 = vmul.f32 %v1352, %v1800
        %v1865 = vmul.f32 %v1353, %v1801
        %v1866 = vmul.f32 %v1354, %v1802
        %v1867 = vmul.f32 %v1355, %v1803
        %v1868 = vmul.f32 %v1356, %v1804
        %v1869 = vmul.f32 %v1357, %v1805
        %v1870 = vmul.f32 %v1358, %v1806
        %v1871 = vmul.f32 %v1359, %v1807
        %v1872 = vmul.f32 %v1360, %v1808
        %v1873 = vmul.f32 %v1361, %v1809
        %v1874 = vmul.f32 %v1362, %v1810
        %v1875 = vmul.f32 %v1363, %v1811
        %v1876 = vmul.f32 %v1364, %v1812
        %v1877 = vmul.f32 %v1365, %v1813
        %v1878 = vmul.f32 %v1366, %v1814
        %v1879 = vmul.f32 %v1367, %v1815
        %v1880 = vmul.f32 %v1368, %v1816
        %v1881 = vmul.f32 %v1369, %v1817
        %v1882 = vmul.f32 %v1370, %v1818
        %v1883 = vmul.f32 %v1371, %v1819
        %v1884 = vmul.f32 %v1372, %v1820
        %v1885 = vmul.f32 %v1373, %v1821
        %v1886 = vmul.f32 %v1374, %v1822
        %v1887 = vmul.f32 %v1375, %v1823
        %v1888 = vmul.f32 %v1376, %v1824
        %v1889 = vmul.f32 %v1377, %v1825
        %v1890 = vmul.f32 %v1378, %v1826
        %v1891 = vmul.f32 %v1379, %v1827
        %v1892 = vmul.f32 %v1380, %v1828
        %v1893 = vmul.f32 %v1381, %v1829
        %v1894 = vld [vmem:[%s395] sm:$0xff]
        %v1895 = vld [vmem:[%s395 + $0x8] sm:$0xff]
        %v1896 = vld [vmem:[%s395 + $0x10] sm:$0xff]
        %v1897 = vld [vmem:[%s395 + $0x18] sm:$0xff]
        %v1898 = vld [vmem:[%s395 + $0x20] sm:$0xff]
        %v1899 = vld [vmem:[%s395 + $0x28] sm:$0xff]
        %v1900 = vld [vmem:[%s395 + $0x30] sm:$0xff]
        %v1901 = vld [vmem:[%s395 + $0x38] sm:$0xff]
        %v1902 = vld [vmem:[%s395 + $0x40] sm:$0xff]
        %v1903 = vld [vmem:[%s395 + $0x48] sm:$0xff]
        %v1904 = vld [vmem:[%s395 + $0x50] sm:$0xff]
        %v1905 = vld [vmem:[%s395 + $0x58] sm:$0xff]
        %v1906 = vld [vmem:[%s395 + $0x60] sm:$0xff]
        %v1907 = vld [vmem:[%s395 + $0x68] sm:$0xff]
        %v1908 = vld [vmem:[%s395 + $0x70] sm:$0xff]
        %v1909 = vld [vmem:[%s395 + $0x78] sm:$0xff]
        %v1910 = vpack.c.bf16 %v1834, %v1830
        %v1911 = vpack.c.bf16 %v1835, %v1831
        %v1912 = vpack.c.bf16 %v1836, %v1832
        %v1913 = vpack.c.bf16 %v1837, %v1833
        %v1914 = vpack.c.bf16 %v1842, %v1838
        %v1915 = vpack.c.bf16 %v1843, %v1839
        %v1916 = vpack.c.bf16 %v1844, %v1840
        %v1917 = vpack.c.bf16 %v1845, %v1841
        %v1918 = vpack.c.bf16 %v1850, %v1846
        %v1919 = vpack.c.bf16 %v1851, %v1847
        %v1920 = vpack.c.bf16 %v1852, %v1848
        %v1921 = vpack.c.bf16 %v1853, %v1849
        %v1922 = vpack.c.bf16 %v1858, %v1854
        %v1923 = vpack.c.bf16 %v1859, %v1855
        %v1924 = vpack.c.bf16 %v1860, %v1856
        %v1925 = vpack.c.bf16 %v1861, %v1857
        %v1926 = vpack.c.bf16 %v1866, %v1862
        %v1927 = vpack.c.bf16 %v1867, %v1863
        %v1928 = vpack.c.bf16 %v1868, %v1864
        %v1929 = vpack.c.bf16 %v1869, %v1865
        %v1930 = vpack.c.bf16 %v1874, %v1870
        %v1931 = vpack.c.bf16 %v1875, %v1871
        %v1932 = vpack.c.bf16 %v1876, %v1872
        %v1933 = vpack.c.bf16 %v1877, %v1873
        %v1934 = vpack.c.bf16 %v1882, %v1878
        %v1935 = vpack.c.bf16 %v1883, %v1879
        %v1936 = vpack.c.bf16 %v1884, %v1880
        %v1937 = vpack.c.bf16 %v1885, %v1881
        %v1938 = vpack.c.bf16 %v1890, %v1886
        %v1939 = vpack.c.bf16 %v1891, %v1887
        %v1940 = vpack.c.bf16 %v1892, %v1888
        %v1941 = vpack.c.bf16 %v1893, %v1889
        %v1942 = vld [vmem:[#allocation11] sm:$0xf]
        %v1943 = vld [vmem:[#allocation11 + $0x4] sm:$0xf]
        %v1944 = vld [vmem:[#allocation11 + $0x8] sm:$0xf]
        %v1945 = vld [vmem:[#allocation11 + $0xc] sm:$0xf]
        %v1946 = vld [vmem:[#allocation11 + $0x10] sm:$0xf]
        %v1947 = vld [vmem:[#allocation11 + $0x14] sm:$0xf]
        %v1948 = vld [vmem:[#allocation11 + $0x18] sm:$0xf]
        %v1949 = vld [vmem:[#allocation11 + $0x1c] sm:$0xf]
        %v1950 = vld [vmem:[#allocation11 + $0x20] sm:$0xf]
        %v1951 = vld [vmem:[#allocation11 + $0x24] sm:$0xf]
        %v1952 = vld [vmem:[#allocation11 + $0x28] sm:$0xf]
        %v1953 = vld [vmem:[#allocation11 + $0x2c] sm:$0xf]
        %v1954 = vld [vmem:[#allocation11 + $0x30] sm:$0xf]
        %v1955 = vld [vmem:[#allocation11 + $0x34] sm:$0xf]
        %v1956 = vld [vmem:[#allocation11 + $0x38] sm:$0xf]
        %v1957 = vld [vmem:[#allocation11 + $0x3c] sm:$0xf]
        %v1958 = vld [vmem:[#allocation11 + $0x40] sm:$0xf]
        %v1959 = vld [vmem:[#allocation11 + $0x44] sm:$0xf]
        %v1960 = vld [vmem:[#allocation11 + $0x48] sm:$0xf]
        %v1961 = vld [vmem:[#allocation11 + $0x4c] sm:$0xf]
        %v1962 = vld [vmem:[#allocation11 + $0x50] sm:$0xf]
        %v1963 = vld [vmem:[#allocation11 + $0x54] sm:$0xf]
        %v1964 = vld [vmem:[#allocation11 + $0x58] sm:$0xf]
        %v1965 = vld [vmem:[#allocation11 + $0x5c] sm:$0xf]
        %v1966 = vld [vmem:[#allocation11 + $0x60] sm:$0xf]
        %v1967 = vld [vmem:[#allocation11 + $0x64] sm:$0xf]
        %v1968 = vld [vmem:[#allocation11 + $0x68] sm:$0xf]
        %v1969 = vld [vmem:[#allocation11 + $0x6c] sm:$0xf]
        %v1970 = vld [vmem:[#allocation11 + $0x70] sm:$0xf]
        %v1971 = vld [vmem:[#allocation11 + $0x74] sm:$0xf]
        %v1972 = vld [vmem:[#allocation11 + $0x78] sm:$0xf]
        %v1973 = vld [vmem:[#allocation11 + $0x7c] sm:$0xf]
        %v1974 = vld [vmem:[#allocation11 + $0x80] sm:$0xf]
        %v1975 = vld [vmem:[#allocation11 + $0x84] sm:$0xf]
        %v1976 = vld [vmem:[#allocation11 + $0x88] sm:$0xf]
        %v1977 = vld [vmem:[#allocation11 + $0x8c] sm:$0xf]
        %v1978 = vld [vmem:[#allocation11 + $0x90] sm:$0xf]
        %v1979 = vld [vmem:[#allocation11 + $0x94] sm:$0xf]
        %v1980 = vld [vmem:[#allocation11 + $0x98] sm:$0xf]
        %v1981 = vld [vmem:[#allocation11 + $0x9c] sm:$0xf]
        %v1982 = vld [vmem:[#allocation11 + $0xa0] sm:$0xf]
        %v1983 = vld [vmem:[#allocation11 + $0xa4] sm:$0xf]
        %v1984 = vld [vmem:[#allocation11 + $0xa8] sm:$0xf]
        %v1985 = vld [vmem:[#allocation11 + $0xac] sm:$0xf]
        %v1986 = vld [vmem:[#allocation11 + $0xb0] sm:$0xf]
        %v1987 = vld [vmem:[#allocation11 + $0xb4] sm:$0xf]
        %v1988 = vld [vmem:[#allocation11 + $0xb8] sm:$0xf]
        %v1989 = vld [vmem:[#allocation11 + $0xbc] sm:$0xf]
        %v1990 = vld [vmem:[#allocation11 + $0xc0] sm:$0xf]
        %v1991 = vld [vmem:[#allocation11 + $0xc4] sm:$0xf]
        %v1992 = vld [vmem:[#allocation11 + $0xc8] sm:$0xf]
        %v1993 = vld [vmem:[#allocation11 + $0xcc] sm:$0xf]
        %v1994 = vld [vmem:[#allocation11 + $0xd0] sm:$0xf]
        %v1995 = vld [vmem:[#allocation11 + $0xd4] sm:$0xf]
        %v1996 = vld [vmem:[#allocation11 + $0xd8] sm:$0xf]
        %v1997 = vld [vmem:[#allocation11 + $0xdc] sm:$0xf]
        %v1998 = vld [vmem:[#allocation11 + $0xe0] sm:$0xf]
        %v1999 = vld [vmem:[#allocation11 + $0xe4] sm:$0xf]
        %v2000 = vld [vmem:[#allocation11 + $0xe8] sm:$0xf]
        %v2001 = vld [vmem:[#allocation11 + $0xec] sm:$0xf]
        %v2002 = vld [vmem:[#allocation11 + $0xf0] sm:$0xf]
        %v2003 = vld [vmem:[#allocation11 + $0xf4] sm:$0xf]
        %v2004 = vld [vmem:[#allocation11 + $0xf8] sm:$0xf]
        %v2005 = vld [vmem:[#allocation11 + $0xfc] sm:$0xf]
        %v2070 = vunpack.c.l.b16 %v1942
        %v2071 = vunpack.c.l.b16 %v1943
        %v2072 = vunpack.c.l.b16 %v1944
        %v2073 = vunpack.c.l.b16 %v1945
        %v2074 = vunpack.c.l.b16 %v1946
        %v2075 = vunpack.c.l.b16 %v1947
        %v2076 = vunpack.c.l.b16 %v1948
        %v2077 = vunpack.c.l.b16 %v1949
        %v2078 = vunpack.c.l.b16 %v1950
        %v2079 = vunpack.c.l.b16 %v1951
        %v2080 = vunpack.c.l.b16 %v1952
        %v2081 = vunpack.c.l.b16 %v1953
        %v2082 = vunpack.c.l.b16 %v1954
        %v2083 = vunpack.c.l.b16 %v1955
        %v2084 = vunpack.c.l.b16 %v1956
        %v2085 = vunpack.c.l.b16 %v1957
        %v2086 = vunpack.c.l.b16 %v1958
        %v2087 = vunpack.c.l.b16 %v1959
        %v2088 = vunpack.c.l.b16 %v1960
        %v2089 = vunpack.c.l.b16 %v1961
        %v2090 = vunpack.c.l.b16 %v1962
        %v2091 = vunpack.c.l.b16 %v1963
        %v2092 = vunpack.c.l.b16 %v1964
        %v2093 = vunpack.c.l.b16 %v1965
        %v2094 = vunpack.c.l.b16 %v1966
        %v2095 = vunpack.c.l.b16 %v1967
        %v2096 = vunpack.c.l.b16 %v1968
        %v2097 = vunpack.c.l.b16 %v1969
        %v2098 = vunpack.c.l.b16 %v1970
        %v2099 = vunpack.c.l.b16 %v1971
        %v2100 = vunpack.c.l.b16 %v1972
        %v2101 = vunpack.c.l.b16 %v1973
        %v2102 = vunpack.c.l.b16 %v1974
        %v2103 = vunpack.c.l.b16 %v1975
        %v2104 = vunpack.c.l.b16 %v1976
        %v2105 = vunpack.c.l.b16 %v1977
        %v2106 = vunpack.c.l.b16 %v1978
        %v2107 = vunpack.c.l.b16 %v1979
        %v2108 = vunpack.c.l.b16 %v1980
        %v2109 = vunpack.c.l.b16 %v1981
        %v2110 = vunpack.c.l.b16 %v1982
        %v2111 = vunpack.c.l.b16 %v1983
        %v2112 = vunpack.c.l.b16 %v1984
        %v2113 = vunpack.c.l.b16 %v1985
        %v2114 = vunpack.c.l.b16 %v1986
        %v2115 = vunpack.c.l.b16 %v1987
        %v2116 = vunpack.c.l.b16 %v1988
        %v2117 = vunpack.c.l.b16 %v1989
        %v2118 = vunpack.c.l.b16 %v1990
        %v2119 = vunpack.c.l.b16 %v1991
        %v2120 = vunpack.c.l.b16 %v1992
        %v2121 = vunpack.c.l.b16 %v1993
        %v2122 = vunpack.c.l.b16 %v1994
        %v2123 = vunpack.c.l.b16 %v1995
        %v2124 = vunpack.c.l.b16 %v1996
        %v2125 = vunpack.c.l.b16 %v1997
        %v2126 = vunpack.c.l.b16 %v1998
        %v2127 = vunpack.c.l.b16 %v1999
        %v2128 = vunpack.c.l.b16 %v2000
        %v2129 = vunpack.c.l.b16 %v2001
        %v2130 = vunpack.c.l.b16 %v2002
        %v2131 = vunpack.c.l.b16 %v2003
        %v2132 = vunpack.c.l.b16 %v2004
        %v2133 = vunpack.c.l.b16 %v2005
        %v2134 = vpack.c.b16 %v2071, %v2070
        %v2135 = vpack.c.b16 %v2073, %v2072
        %v2136 = vpack.c.b16 %v2075, %v2074
        %v2137 = vpack.c.b16 %v2077, %v2076
        %v2138 = vpack.c.b16 %v2079, %v2078
        %v2139 = vpack.c.b16 %v2081, %v2080
        %v2140 = vpack.c.b16 %v2083, %v2082
        %v2141 = vpack.c.b16 %v2085, %v2084
        %v2142 = vpack.c.b16 %v2087, %v2086
        %v2143 = vpack.c.b16 %v2089, %v2088
        %v2144 = vpack.c.b16 %v2091, %v2090
        %v2145 = vpack.c.b16 %v2093, %v2092
        %v2146 = vpack.c.b16 %v2095, %v2094
        %v2147 = vpack.c.b16 %v2097, %v2096
        %v2148 = vpack.c.b16 %v2099, %v2098
        %v2149 = vpack.c.b16 %v2101, %v2100
        %v2150 = vpack.c.b16 %v2103, %v2102
        %v2151 = vpack.c.b16 %v2105, %v2104
        %v2152 = vpack.c.b16 %v2107, %v2106
        %v2153 = vpack.c.b16 %v2109, %v2108
        %v2154 = vpack.c.b16 %v2111, %v2110
        %v2155 = vpack.c.b16 %v2113, %v2112
        %v2156 = vpack.c.b16 %v2115, %v2114
        %v2157 = vpack.c.b16 %v2117, %v2116
        %v2158 = vpack.c.b16 %v2119, %v2118
        %v2159 = vpack.c.b16 %v2121, %v2120
        %v2160 = vpack.c.b16 %v2123, %v2122
        %v2161 = vpack.c.b16 %v2125, %v2124
        %v2162 = vpack.c.b16 %v2127, %v2126
        %v2163 = vpack.c.b16 %v2129, %v2128
        %v2164 = vpack.c.b16 %v2131, %v2130
        %v2165 = vpack.c.b16 %v2133, %v2132
        %2198 = vmatpush.bf16.msra.mxu0 %v2141
        %2199 = vmatpush.bf16.msra.mxu0 %v2140
        %2200 = vmatpush.bf16.msra.mxu0 %v2139
        %2201 = vmatpush.bf16.msra.mxu0 %v2138
        %2202 = vmatpush.bf16.msra.mxu0 %v2137
        %2203 = vmatpush.bf16.msra.mxu0 %v2136
        %2204 = vmatpush.bf16.msra.mxu0 %v2135
        %2205 = vmatpush.bf16.msra.mxu0 %v2134
        %2206 = vmatmul.bf16.gmra.mxu0 %v1910
        %v2207 = vpop.f32.mrf.mxu0
        %v2208 = vadd.f32 0.0, %v2207
        %v2209 = vpop.f32.mrf.mxu0
        %v2210 = vadd.f32 0.0, %v2209
        %2211 = vmatmul.bf16.gmra.mxu0 %v1914
        %v2212 = vpop.f32.mrf.mxu0
        %v2213 = vadd.f32 0.0, %v2212
        %v2214 = vpop.f32.mrf.mxu0
        %v2215 = vadd.f32 0.0, %v2214
        %2216 = vmatmul.bf16.gmra.mxu0 %v1918
        %v2217 = vpop.f32.mrf.mxu0
        %v2218 = vadd.f32 0.0, %v2217
        %v2219 = vpop.f32.mrf.mxu0
        %v2220 = vadd.f32 0.0, %v2219
        %2221 = vmatmul.bf16.gmra.mxu0 %v1922
        %v2222 = vpop.f32.mrf.mxu0
        %v2223 = vadd.f32 0.0, %v2222
        %v2224 = vpop.f32.mrf.mxu0
        %v2225 = vadd.f32 0.0, %v2224
        %2226 = vmatmul.bf16.gmra.mxu0 %v1926
        %v2227 = vpop.f32.mrf.mxu0
        %v2228 = vadd.f32 0.0, %v2227
        %v2229 = vpop.f32.mrf.mxu0
        %v2230 = vadd.f32 0.0, %v2229
        %2231 = vmatmul.bf16.gmra.mxu0 %v1930
        %v2232 = vpop.f32.mrf.mxu0
        %v2233 = vadd.f32 0.0, %v2232
        %v2234 = vpop.f32.mrf.mxu0
        %v2235 = vadd.f32 0.0, %v2234
        %2236 = vmatmul.bf16.gmra.mxu0 %v1934
        %v2237 = vpop.f32.mrf.mxu0
        %v2238 = vadd.f32 0.0, %v2237
        %v2239 = vpop.f32.mrf.mxu0
        %v2240 = vadd.f32 0.0, %v2239
        %2241 = vmatmul.bf16.gmra.mxu0 %v1938
        %v2242 = vpop.f32.mrf.mxu0
        %v2243 = vadd.f32 0.0, %v2242
        %v2244 = vpop.f32.mrf.mxu0
        %v2245 = vadd.f32 0.0, %v2244
        %2246 = vdwg.mxu0
        %2247 = vmatpush.bf16.msra.mxu0 %v2149
        %2248 = vmatpush.bf16.msra.mxu0 %v2148
        %2249 = vmatpush.bf16.msra.mxu0 %v2147
        %2250 = vmatpush.bf16.msra.mxu0 %v2146
        %2251 = vmatpush.bf16.msra.mxu0 %v2145
        %2252 = vmatpush.bf16.msra.mxu0 %v2144
        %2253 = vmatpush.bf16.msra.mxu0 %v2143
        %2254 = vmatpush.bf16.msra.mxu0 %v2142
        %2255 = vmatmul.bf16.gmra.mxu0 %v1911
        %v2256 = vpop.f32.mrf.mxu0
        %v2257 = vadd.f32 %v2208, %v2256
        %v2258 = vpop.f32.mrf.mxu0
        %v2259 = vadd.f32 %v2210, %v2258
        %2260 = vmatmul.bf16.gmra.mxu0 %v1915
        %v2261 = vpop.f32.mrf.mxu0
        %v2262 = vadd.f32 %v2213, %v2261
        %v2263 = vpop.f32.mrf.mxu0
        %v2264 = vadd.f32 %v2215, %v2263
        %2265 = vmatmul.bf16.gmra.mxu0 %v1919
        %v2266 = vpop.f32.mrf.mxu0
        %v2267 = vadd.f32 %v2218, %v2266
        %v2268 = vpop.f32.mrf.mxu0
        %v2269 = vadd.f32 %v2220, %v2268
        %2270 = vmatmul.bf16.gmra.mxu0 %v1923
        %v2271 = vpop.f32.mrf.mxu0
        %v2272 = vadd.f32 %v2223, %v2271
        %v2273 = vpop.f32.mrf.mxu0
        %v2274 = vadd.f32 %v2225, %v2273
        %2275 = vmatmul.bf16.gmra.mxu0 %v1927
        %v2276 = vpop.f32.mrf.mxu0
        %v2277 = vadd.f32 %v2228, %v2276
        %v2278 = vpop.f32.mrf.mxu0
        %v2279 = vadd.f32 %v2230, %v2278
        %2280 = vmatmul.bf16.gmra.mxu0 %v1931
        %v2281 = vpop.f32.mrf.mxu0
        %v2282 = vadd.f32 %v2233, %v2281
        %v2283 = vpop.f32.mrf.mxu0
        %v2284 = vadd.f32 %v2235, %v2283
        %2285 = vmatmul.bf16.gmra.mxu0 %v1935
        %v2286 = vpop.f32.mrf.mxu0
        %v2287 = vadd.f32 %v2238, %v2286
        %v2288 = vpop.f32.mrf.mxu0
        %v2289 = vadd.f32 %v2240, %v2288
        %2290 = vmatmul.bf16.gmra.mxu0 %v1939
        %v2291 = vpop.f32.mrf.mxu0
        %v2292 = vadd.f32 %v2243, %v2291
        %v2293 = vpop.f32.mrf.mxu0
        %v2294 = vadd.f32 %v2245, %v2293
        %2295 = vdwg.mxu0
        %2296 = vmatpush.bf16.msra.mxu0 %v2157
        %2297 = vmatpush.bf16.msra.mxu0 %v2156
        %2298 = vmatpush.bf16.msra.mxu0 %v2155
        %2299 = vmatpush.bf16.msra.mxu0 %v2154
        %2300 = vmatpush.bf16.msra.mxu0 %v2153
        %2301 = vmatpush.bf16.msra.mxu0 %v2152
        %2302 = vmatpush.bf16.msra.mxu0 %v2151
        %2303 = vmatpush.bf16.msra.mxu0 %v2150
        %2304 = vmatmul.bf16.gmra.mxu0 %v1912
        %v2305 = vpop.f32.mrf.mxu0
        %v2306 = vadd.f32 %v2257, %v2305
        %v2307 = vpop.f32.mrf.mxu0
        %v2308 = vadd.f32 %v2259, %v2307
        %2309 = vmatmul.bf16.gmra.mxu0 %v1916
        %v2310 = vpop.f32.mrf.mxu0
        %v2311 = vadd.f32 %v2262, %v2310
        %v2312 = vpop.f32.mrf.mxu0
        %v2313 = vadd.f32 %v2264, %v2312
        %2314 = vmatmul.bf16.gmra.mxu0 %v1920
        %v2315 = vpop.f32.mrf.mxu0
        %v2316 = vadd.f32 %v2267, %v2315
        %v2317 = vpop.f32.mrf.mxu0
        %v2318 = vadd.f32 %v2269, %v2317
        %2319 = vmatmul.bf16.gmra.mxu0 %v1924
        %v2320 = vpop.f32.mrf.mxu0
        %v2321 = vadd.f32 %v2272, %v2320
        %v2322 = vpop.f32.mrf.mxu0
        %v2323 = vadd.f32 %v2274, %v2322
        %2324 = vmatmul.bf16.gmra.mxu0 %v1928
        %v2325 = vpop.f32.mrf.mxu0
        %v2326 = vadd.f32 %v2277, %v2325
        %v2327 = vpop.f32.mrf.mxu0
        %v2328 = vadd.f32 %v2279, %v2327
        %2329 = vmatmul.bf16.gmra.mxu0 %v1932
        %v2330 = vpop.f32.mrf.mxu0
        %v2331 = vadd.f32 %v2282, %v2330
        %v2332 = vpop.f32.mrf.mxu0
        %v2333 = vadd.f32 %v2284, %v2332
        %2334 = vmatmul.bf16.gmra.mxu0 %v1936
        %v2335 = vpop.f32.mrf.mxu0
        %v2336 = vadd.f32 %v2287, %v2335
        %v2337 = vpop.f32.mrf.mxu0
        %v2338 = vadd.f32 %v2289, %v2337
        %2339 = vmatmul.bf16.gmra.mxu0 %v1940
        %v2340 = vpop.f32.mrf.mxu0
        %v2341 = vadd.f32 %v2292, %v2340
        %v2342 = vpop.f32.mrf.mxu0
        %v2343 = vadd.f32 %v2294, %v2342
        %2344 = vdwg.mxu0
        %2345 = vmatpush.bf16.msra.mxu0 %v2165
        %2346 = vmatpush.bf16.msra.mxu0 %v2164
        %2347 = vmatpush.bf16.msra.mxu0 %v2163
        %2348 = vmatpush.bf16.msra.mxu0 %v2162
        %2349 = vmatpush.bf16.msra.mxu0 %v2161
        %2350 = vmatpush.bf16.msra.mxu0 %v2160
        %2351 = vmatpush.bf16.msra.mxu0 %v2159
        %2352 = vmatpush.bf16.msra.mxu0 %v2158
        %2353 = vmatmul.bf16.gmra.mxu0 %v1913
        %v2354 = vpop.f32.mrf.mxu0
        %v2355 = vadd.f32 %v2306, %v2354
        %v2356 = vpop.f32.mrf.mxu0
        %v2357 = vadd.f32 %v2308, %v2356
        %2358 = vmatmul.bf16.gmra.mxu0 %v1917
        %v2359 = vpop.f32.mrf.mxu0
        %v2360 = vadd.f32 %v2311, %v2359
        %v2361 = vpop.f32.mrf.mxu0
        %v2362 = vadd.f32 %v2313, %v2361
        %2363 = vmatmul.bf16.gmra.mxu0 %v1921
        %v2364 = vpop.f32.mrf.mxu0
        %v2365 = vadd.f32 %v2316, %v2364
        %v2366 = vpop.f32.mrf.mxu0
        %v2367 = vadd.f32 %v2318, %v2366
        %2368 = vmatmul.bf16.gmra.mxu0 %v1925
        %v2369 = vpop.f32.mrf.mxu0
        %v2370 = vadd.f32 %v2321, %v2369
        %v2371 = vpop.f32.mrf.mxu0
        %v2372 = vadd.f32 %v2323, %v2371
        %2373 = vmatmul.bf16.gmra.mxu0 %v1929
        %v2374 = vpop.f32.mrf.mxu0
        %v2375 = vadd.f32 %v2326, %v2374
        %v2376 = vpop.f32.mrf.mxu0
        %v2377 = vadd.f32 %v2328, %v2376
        %2378 = vmatmul.bf16.gmra.mxu0 %v1933
        %v2379 = vpop.f32.mrf.mxu0
        %v2380 = vadd.f32 %v2331, %v2379
        %v2381 = vpop.f32.mrf.mxu0
        %v2382 = vadd.f32 %v2333, %v2381
        %2383 = vmatmul.bf16.gmra.mxu0 %v1937
        %v2384 = vpop.f32.mrf.mxu0
        %v2385 = vadd.f32 %v2336, %v2384
        %v2386 = vpop.f32.mrf.mxu0
        %v2387 = vadd.f32 %v2338, %v2386
        %2388 = vmatmul.bf16.gmra.mxu0 %v1941
        %v2389 = vpop.f32.mrf.mxu0
        %v2390 = vadd.f32 %v2341, %v2389
        %v2391 = vpop.f32.mrf.mxu0
        %v2392 = vadd.f32 %v2343, %v2391
        %2393 = vdwg.mxu0
        %v2394 = vadd.f32 %v1894, %v2355
        %v2395 = vadd.f32 %v1895, %v2357
        %v2396 = vadd.f32 %v1896, %v2360
        %v2397 = vadd.f32 %v1897, %v2362
        %v2398 = vadd.f32 %v1898, %v2365
        %v2399 = vadd.f32 %v1899, %v2367
        %v2400 = vadd.f32 %v1900, %v2370
        %v2401 = vadd.f32 %v1901, %v2372
        %v2402 = vadd.f32 %v1902, %v2375
        %v2403 = vadd.f32 %v1903, %v2377
        %v2404 = vadd.f32 %v1904, %v2380
        %v2405 = vadd.f32 %v1905, %v2382
        %v2406 = vadd.f32 %v1906, %v2385
        %v2407 = vadd.f32 %v1907, %v2387
        %v2408 = vadd.f32 %v1908, %v2390
        %v2409 = vadd.f32 %v1909, %v2392
        %2410 = vst [vmem:[%s395] sm:$0xff] %v2394
        %2411 = vst [vmem:[%s395 + $0x8] sm:$0xff] %v2395
        %2412 = vst [vmem:[%s395 + $0x10] sm:$0xff] %v2396
        %2413 = vst [vmem:[%s395 + $0x18] sm:$0xff] %v2397
        %2414 = vst [vmem:[%s395 + $0x20] sm:$0xff] %v2398
        %2415 = vst [vmem:[%s395 + $0x28] sm:$0xff] %v2399
        %2416 = vst [vmem:[%s395 + $0x30] sm:$0xff] %v2400
        %2417 = vst [vmem:[%s395 + $0x38] sm:$0xff] %v2401
        %2418 = vst [vmem:[%s395 + $0x40] sm:$0xff] %v2402
        %2419 = vst [vmem:[%s395 + $0x48] sm:$0xff] %v2403
        %2420 = vst [vmem:[%s395 + $0x50] sm:$0xff] %v2404
        %2421 = vst [vmem:[%s395 + $0x58] sm:$0xff] %v2405
        %2422 = vst [vmem:[%s395 + $0x60] sm:$0xff] %v2406
        %2423 = vst [vmem:[%s395 + $0x68] sm:$0xff] %v2407
        %2424 = vst [vmem:[%s395 + $0x70] sm:$0xff] %v2408
        %2425 = vst [vmem:[%s395 + $0x78] sm:$0xff] %v2409
        %s2426 = sand.u32 %s213, 1
        %s2427 = scalar_lea.sflag [#allocation5], %s2426
        %s2428 = sand.u32 %s213, 1
        %s2429 = smul.addr %s2428, 128
        %s2430 = scalar_lea.vmem [#allocation12], %s2429
        // Predicated region
        $region73: #{tpu_custom_call.1} parent=47 // pred_check
          %p2431 = pneg %p223
        $region74: #{tpu_custom_call.1} parent=47 // pred_check_branch
          %2433 = sbr.rel (%p2431) target = $region76
        $region75: #{tpu_custom_call.1} parent=47 // pred_region
          %s2434 = smul.u32 16, %s30
          %2436 = vsyncadd %s2427, 0
          %s2437 = smul.addr %s2434, 8
          %s2438 = scalar_lea.hbm %s7, %s2437
          %s2439 = sshll.u32 %s2430, 4
          %s2440 = int_to_ptr.vmem [resolvable:$true] %s2439
          %s2441 = sshll.u32 %s2438, 4
          %s2442 = int_to_ptr.hbm [resolvable:$true] %s2441
          %2447 = dma.vmem_to_hbm [thread:$0]  %s2440, 2048, %s2442, %s2427, 128, 128, 8
        $region76: #{tpu_custom_call.1} parent=47 // pred_fallthru
          _
      $region48: #{tpu_custom_call.1} parent=5 // pred_fallthru
        _
      %p2448 = scmp.le.s32.totalorder 2, %s21
      // Predicated region
      $region77: #{tpu_custom_call.1} parent=5 // pred_check
        %p2449 = pneg %p2448
      $region78: #{tpu_custom_call.1} parent=5 // pred_check_branch
        %2451 = sbr.rel (%p2449) target = $region80
      $region79: #{tpu_custom_call.1} parent=5 // pred_region
        %s2452 = ssub.s32 %s21, 2
        // Predicated region
        $region81: #{tpu_custom_call.1} parent=79 // pred_check
          %p2453 = pneg %p229
        $region82: #{tpu_custom_call.1} parent=79 // pred_check_branch
          %2455 = sbr.rel (%p2453) target = $region84
        $region83: #{tpu_custom_call.1} parent=79 // pred_region
          %s2456 = sand.u32 %s214, 1
          %s2457 = scalar_lea.sflag [#allocation5], %s2456
          %s2458 = sand.u32 %s214, 1
          %s2459 = smul.addr %s2458, 128
          %s2460 = scalar_lea.vmem [#allocation12], %s2459
          %2462 = dma.done %s2457, 2048
        $region84: #{tpu_custom_call.1} parent=79 // pred_fallthru
          _
      $region80: #{tpu_custom_call.1} parent=5 // pred_fallthru
        _
    $region6: #{tpu_custom_call.1} parent=1 // loop_footer
      %s25 = sadd.s32 1, %s21
    $region7: #{tpu_custom_call.1} parent=1 // loop_footer_branch
      %20 = sbr.rel target = $region3
    $region8: #{tpu_custom_call.1} parent=1 // loop_exit
      _
    %2463 = vsyncpa [#allocation4], 1
    %s2464 = scalar_lea.sflag [#allocation4], 1
    %2465 = vsyncpa %s2464, 1
    %2466 = vsyncpa [#allocation7], 1
    %2467 = vsyncpa [#allocation10], 1
    %2468 = vsyncpa [#allocation5], 1
    %s2469 = scalar_lea.sflag [#allocation5], 1
    %2470 = vsyncpa %s2469, 1

</llo_original>
